<compile_context>
chip_gen: v5e
topology: v5e:2x2
jax: 0.10.0
libtpu: 0.0.40
codegen_flags: <defaults>
</compile_context>

<pallas_src>
import functools

import numpy as np
import jax
import jax.numpy as jnp
from jax.experimental import pallas as pl
from jax.experimental.pallas import tpu as pltpu

# ---- module constants (from AVC.py) -----------------------------------------
INIT_OUT_CHANNELS = 3
AUD_INPUT_PARAMS = (2, INIT_OUT_CHANNELS, 3, 1)     # Conv1d(in=2, out=3, k=3, s=1)
BANDWIDTH_LIMIT = 16
CONV2_PARAMS = (INIT_OUT_CHANNELS, 8, 3, 2)         # Conv1d(in=3, out=8, k=3, s=2)
POOL1_OUT = 10000
POOL2_OUT = BANDWIDTH_LIMIT * BANDWIDTH_LIMIT       # 256

C_IN = 2                                            # conv1 input channels
C_MID = INIT_OUT_CHANNELS                           # 3
C_OUT = 8                                           # conv2 output channels
K1 = 3                                              # conv1 kernel size
K2 = 3                                              # conv2 kernel size
S2 = 2                                              # conv2 stride
QCOLS = K2 * POOL2_OUT                              # 768 (wide folded operator)

_LANE = 128
_SUBLANE = 8
_DEFAULT_SAMPLES_PER_STEP = 80       # 3*80 = 240 MXU rows (v6e/v7x); use ~40 on v5e
_DEFAULT_TILE_L = 1024               # l1 columns of Q streamed per reduction step
_VMEM_BUDGET = 24 * 1024 * 1024      # per-step working-set target (fits every gen)


def _round_up(x, m):
    return ((x + m - 1) // m) * m


# ---- host-side (numpy) precompute of the folded pooling operator ------------
def _adaptive_avg_pool1d_matrix_np(l_in, l_out):
    """Dense P (l_in, l_out) with AdaptiveAvgPool1d(l_out)(x) == x @ P."""
    i = np.arange(l_out)
    starts = (i * l_in) // l_out
    ends = ((i + 1) * l_in + l_out - 1) // l_out     # ceil
    j = np.arange(l_in)
    mask = (j[:, None] >= starts[None, :]) & (j[:, None] < ends[None, :])
    return mask.astype(np.float64) / (ends - starts).astype(np.float64)[None, :]


@functools.lru_cache(maxsize=None)
def _folded_qwide_np(l1):
    """Qwide (l1, 768) f32; columns [k*256:(k+1)*256] = P1[:, k::2][:, :l2] @ P2."""
    l2 = (POOL1_OUT - K2) // S2 + 1                  # conv2 output length (4999)
    p1 = _adaptive_avg_pool1d_matrix_np(l1, POOL1_OUT)
    p2 = _adaptive_avg_pool1d_matrix_np(l2, POOL2_OUT)
    q = np.concatenate([p1[:, k:k + S2 * l2:S2] @ p2 for k in range(K2)], axis=1)
    return np.ascontiguousarray(q, dtype=np.float32)


@functools.lru_cache(maxsize=None)
def _folded_q_device(l1, l1_pad, dtype):
    """Zero-row-padded (l1_pad, 768) folded operator, cached resident on device."""
    q = np.zeros((l1_pad, QCOLS), dtype=np.float32)
    q[:l1] = _folded_qwide_np(l1)
    return jnp.asarray(q, dtype=dtype)               # device-resident, reused across calls


# ---- Pallas kernel -----------------------------------------------------------
def _audio_encoder_kernel(w1_ref, b1_ref, w2_ref, b2_ref, x_ref, q_ref,
                          o_ref, y_ref, s_ref, *, B, TL):
    """Grid = (batch_tiles, l1_tiles); reduction over l1 tiles is the LAST axis.

      w1_ref (18,) SMEM   conv1 weight, flat (c, ci, k)
      b1_ref (3,)  SMEM   conv1 bias
      w2_ref (72,) SMEM   conv2 weight, flat (o, c, k)
      b2_ref (8,)  SMEM   conv2 bias (pool2 column sums are exactly 1)
      x_ref  (2, B, L_pad)   VMEM   input block, resident across the l1 axis
      q_ref  (TL, 768)       VMEM   streamed folded pool1->conv2->pool2 tile
      o_ref  (8, B, 256)     VMEM   output block, written at the last l1 tile
      y_ref  (3B, TL)  f32   VMEM scratch: stacked conv1 rows (channel-major)
      s_ref  (3B, 768) f32   VMEM scratch: GEMM accumulator
    """
    l = pl.program_id(1)
    nl = pl.num_programs(1)

    @pl.when(l == 0)
    def _init():
        s_ref[...] = jnp.zeros_like(s_ref)

    # ---- conv1 on the VPU: 6 shifted x slabs, 18 scalar-broadcast FMAs ------
    base = pl.multiple_of(l * TL, _LANE)             # lane-aligned dynamic start
    chunk = TL + _LANE                               # K1-1 halo rounded to a lane tile
    xs = []
    for ci in range(C_IN):
        xc = x_ref[ci, :, pl.ds(base, chunk)]        # (B, TL+128), aligned load
        xs.append([xc[:, k:k + TL] for k in range(K1)])   # static lane shifts

    for c in range(C_MID):
        y = b1_ref[c] + xs[0][0] * w1_ref[c * C_IN * K1]
        for ci in range(C_IN):
            for k in range(K1):
                if ci == 0 and k == 0:
                    continue
                y = y + xs[ci][k] * w1_ref[c * C_IN * K1 + ci * K1 + k]
        y_ref[c * B:(c + 1) * B, :] = y              # rows c*B .. c*B+B-1

    # ---- dominant GEMM: (3B, TL) @ (TL, 768), f32 accumulation on the MXU ----
    s_ref[...] += jnp.dot(y_ref[...].astype(q_ref.dtype), q_ref[...],
                          preferred_element_type=jnp.float32)

    # ---- finalize: tiny 9-tap W2 contraction on the VPU, + conv2 bias -------
    @pl.when(l == nl - 1)
    def _finalize():
        for o in range(C_OUT):
            acc = None
            for c in range(C_MID):
                for k in range(K2):
                    w = w2_ref[(o * C_MID + c) * K2 + k]
                    term = w * s_ref[c * B:(c + 1) * B,
                                     k * POOL2_OUT:(k + 1) * POOL2_OUT]
                    acc = term if acc is None else acc + term
            o_ref[o] = acc + b2_ref[o]               # dense (B, 256) store per channel


# ---- wrapper -----------------------------------------------------------------
def audio_encoder_forward(x, w1, b1, w2, b2, *,
                          samples_per_step=None, tile_l=None,
                          q_dtype=jnp.float32):
    n, c_in, length = x.shape
    assert c_in == C_IN and w1.shape == (C_MID, C_IN, K1) and w2.shape == (C_OUT, C_MID, K2)
    l1 = length - (K1 - 1)
    assert l1 >= 1, "input too short for conv1"

    q_np_dtype = jnp.dtype(q_dtype)
    q_bytes = q_np_dtype.itemsize
    f32 = jnp.float32

    # -- tile sizes: B samples/step (mult of 8), TL l1-cols/step (mult of 128) --
    B = _round_up(min(samples_per_step or _DEFAULT_SAMPLES_PER_STEP, max(n, 1)), _SUBLANE)
    TL = _round_up(min(tile_l or _DEFAULT_TILE_L, _round_up(l1, _LANE)), _LANE)

    def vmem_need(b, tl):
        l1p = _round_up(l1, tl)
        lpad = l1p + _LANE
        return (2 * C_IN * b * lpad * 4              # x block (double-buffered)
                + 2 * tl * QCOLS * q_bytes           # Q tile (double-buffered)
                + 2 * C_OUT * b * POOL2_OUT * 4      # out block (double-buffered)
                + C_MID * b * tl * 4                 # y scratch
                + C_MID * b * QCOLS * 4)             # accumulator scratch

    while vmem_need(B, TL) > _VMEM_BUDGET and TL > _LANE:
        TL = max(_LANE, (TL // 2) // _LANE * _LANE)
    while vmem_need(B, TL) > _VMEM_BUDGET and B > _SUBLANE:
        B -= _SUBLANE
    # NOTE: for extremely long raw audio the resident x block can still dominate;
    # streaming x along L with a K1-1 halo DMA would bound it (not needed here).

    nl = -(-l1 // TL)
    l1_pad = nl * TL
    l_pad = l1_pad + _LANE                           # halo room for aligned chunk loads
    n_pad = _round_up(max(n, 1), B)
    nb = n_pad // B

    # input: zero-pad batch/length, channels-first -> (2, N_pad, L_pad)
    xt = jnp.transpose(
        jnp.pad(x.astype(f32), ((0, n_pad - n), (0, 0), (0, l_pad - length))),
        (1, 0, 2))

    # folded pool1->conv2->pool2 operator, built once and cached on device
    q = _folded_q_device(l1, l1_pad, q_np_dtype)

    # scalar parameters -> SMEM (flattened 1-D)
    w1f = jnp.asarray(w1, f32).reshape(-1)           # (18,)  (c, ci, k)
    b1f = jnp.asarray(b1, f32).reshape(-1)           # (3,)
    w2f = jnp.asarray(w2, f32).reshape(-1)           # (72,)  (o, c, k)
    b2f = jnp.asarray(b2, f32).reshape(-1)           # (8,)

    kernel = functools.partial(_audio_encoder_kernel, B=B, TL=TL)
    smem_spec = pl.BlockSpec(memory_space=pltpu.MemorySpace.SMEM)

    flops = (2 * nb * (C_MID * B) * l1_pad * QCOLS          # dominant GEMM
             + 2 * n_pad * C_MID * C_IN * K1 * l1_pad       # conv1 FMAs
             + 2 * n_pad * C_OUT * C_MID * K2 * POOL2_OUT)  # W2 finalize
    bytes_accessed = (nb * l1_pad * QCOLS * q_bytes         # Q streamed per batch tile
                      + C_IN * n_pad * l_pad * 4            # x read once
                      + n_pad * C_OUT * POOL2_OUT * 4)      # output

    out_t = pl.pallas_call(
        kernel,
        out_shape=jax.ShapeDtypeStruct((C_OUT, n_pad, POOL2_OUT), f32),
        grid_spec=pltpu.PrefetchScalarGridSpec(
            num_scalar_prefetch=0,
            grid=(nb, nl),                                   # reduction axis last
            in_specs=[
                smem_spec, smem_spec, smem_spec, smem_spec,  # w1, b1, w2, b2
                pl.BlockSpec((C_IN, B, l_pad), lambda i, l: (0, i, 0)),
                pl.BlockSpec((TL, QCOLS), lambda i, l: (l, 0)),
            ],
            out_specs=pl.BlockSpec((C_OUT, B, POOL2_OUT), lambda i, l: (0, i, 0)),
            scratch_shapes=[
                pltpu.VMEM((C_MID * B, TL), f32),            # stacked conv1 rows
                pltpu.VMEM((C_MID * B, QCOLS), f32),         # GEMM accumulator
            ],
        ),
        compiler_params=pltpu.CompilerParams(
            dimension_semantics=("parallel", "arbitrary"),   # batch across cores
            vmem_limit_bytes=int(min(max(2 * vmem_need(B, TL), 32 * 1024 * 1024),
                                     64 * 1024 * 1024)),
        ),
        cost_estimate=pl.CostEstimate(flops=int(flops), transcendentals=0,
                                      bytes_accessed=int(bytes_accessed)),
    )(w1f, b1f, w2f, b2f, xt, q)

    return jnp.transpose(out_t, (1, 0, 2))[:n]               # (N, 8, 256)


# ---- pure-JAX reference (independent path: lax conv + pool matrices) ---------
def _adaptive_avg_pool1d_matrix_jnp(l_in, l_out, dtype=jnp.float32):
    i = jnp.arange(l_out)
    starts = (i * l_in) // l_out
    ends = ((i + 1) * l_in + l_out - 1) // l_out
    j = jnp.arange(l_in)
    mask = (j[:, None] >= starts[None, :]) & (j[:, None] < ends[None, :])
    return mask.astype(dtype) / (ends - starts).astype(dtype)[None, :]


def reference_forward(x, w1, b1, w2, b2):
    y1 = jax.lax.conv_general_dilated(
        x, w1, window_strides=(1,), padding="VALID",
        dimension_numbers=("NCH", "OIH", "NCH")) + b1[None, :, None]
    p1 = jnp.einsum("ncl,lm->ncm", y1,
                    _adaptive_avg_pool1d_matrix_jnp(y1.shape[-1], POOL1_OUT))
    y2 = jax.lax.conv_general_dilated(
        p1, w2, window_strides=(S2,), padding="VALID",
        dimension_numbers=("NCH", "OIH", "NCH")) + b2[None, :, None]
    return jnp.einsum("ncl,lm->ncm", y2,
                      _adaptive_avg_pool1d_matrix_jnp(y2.shape[-1], POOL2_OUT))


if __name__ == "__main__":
    key = jax.random.PRNGKey(0)
    k1, k2, k3, k4, kx = jax.random.split(key, 5)

    # Conv1d(2, 3, kernel_size=3, stride=1): weight (3, 2, 3), bias (3,)
    in1, out1, ks1, _ = AUD_INPUT_PARAMS
    bound1 = 1.0 / np.sqrt(in1 * ks1)
    w1 = jax.random.uniform(k1, (out1, in1, ks1), jnp.float32, -bound1, bound1)
    b1 = jax.random.uniform(k2, (out1,), jnp.float32, -bound1, bound1)

    # Conv1d(3, 8, kernel_size=3, stride=2): weight (8, 3, 3), bias (8,)
    in2, out2, ks2, _ = CONV2_PARAMS
    bound2 = 1.0 / np.sqrt(in2 * ks2)
    w2 = jax.random.uniform(k3, (out2, in2, ks2), jnp.float32, -bound2, bound2)
    b2 = jax.random.uniform(k4, (out2,), jnp.float32, -bound2, bound2)

    # Small test: batch=4 (pads to B=8), seq=322 -> l1=320; tile_l=128 gives 3
    # reduction tiles, exercising init / accumulate / finalize and Q zero-padding.
    N, L = 4, 322
    x = jax.random.normal(kx, (N, in1, L), jnp.float32)

    out = jax.block_until_ready(audio_encoder_forward(x, w1, b1, w2, b2, tile_l=128))
    assert out.shape == (N, out2, POOL2_OUT)

    ref = jax.block_until_ready(reference_forward(x, w1, b1, w2, b2))
    np.testing.assert_allclose(np.asarray(out), np.asarray(ref),
                               rtol=1e-3, atol=1e-4)

    # bf16-Q fast path (bf16-native MXUs); f32 accumulation, looser tolerance.
    out_bf16 = jax.block_until_ready(
        audio_encoder_forward(x, w1, b1, w2, b2, tile_l=128, q_dtype=jnp.bfloat16))
    np.testing.assert_allclose(np.asarray(out_bf16), np.asarray(ref),
                               rtol=5e-2, atol=5e-2)

    print("KERNEL_OK")
</pallas_src>

<mosaic_0001>
module attributes {stable_mosaic.version = 11 : i64} {
  func.func @_audio_encoder_kernel(%arg0: i32, %arg1: i32, %arg2: memref<18xf32, #tpu.memory_space<smem>>, %arg3: memref<3xf32, #tpu.memory_space<smem>>, %arg4: memref<72xf32, #tpu.memory_space<smem>>, %arg5: memref<8xf32, #tpu.memory_space<smem>>, %arg6: memref<2x8x512xf32, #tpu.memory_space<vmem>>, %arg7: memref<128x768xf32, #tpu.memory_space<vmem>>, %arg8: memref<8x8x256xf32, #tpu.memory_space<vmem>>, %arg9: memref<24x128xf32, #tpu.memory_space<vmem>>, %arg10: memref<24x768xf32, #tpu.memory_space<vmem>>) attributes {dimension_semantics = [#tpu.dimension_semantics<parallel>, #tpu.dimension_semantics<arbitrary>], iteration_bounds = array<i64: 1, 3>, scalar_prefetch = 0 : i64, scratch_operands = 2 : i64, tpu.core_type = #tpu.core_type<tc>, window_params = [{transform_indices = @transform_0, window_bounds = array<i64: 18>}, {transform_indices = @transform_1, window_bounds = array<i64: 3>}, {transform_indices = @transform_2, window_bounds = array<i64: 72>}, {transform_indices = @transform_3, window_bounds = array<i64: 8>}, {transform_indices = @transform_4, window_bounds = array<i64: 2, 8, 512>}, {transform_indices = @transform_5, window_bounds = array<i64: 128, 768>}, {transform_indices = @transform_6, window_bounds = array<i64: 8, 8, 256>}]} {
    %c0_i32 = arith.constant 0 : i32
    %0 = arith.cmpi eq, %arg1, %c0_i32 : i32
    %1 = arith.extui %0 : i1 to i32
    %c0_i32_0 = arith.constant 0 : i32
    %2 = arith.cmpi ne, %1, %c0_i32_0 : i32
    scf.if %2 {
      %cst_23 = arith.constant 0.000000e+00 : f32
      %107 = vector.broadcast %cst_23 : f32 to vector<24x768xf32>
      %c0_24 = arith.constant 0 : index
      %c0_25 = arith.constant 0 : index
      %108 = vector.load %arg10[%c0_24, %c0_25] : memref<24x768xf32, #tpu.memory_space<vmem>>, vector<24x768xf32>
      tpu.vector_store %arg10[%c0_24, %c0_25], %107 {strides = array<i32>} : memref<24x768xf32, #tpu.memory_space<vmem>>, vector<24x768xf32>,
    } else {
    }
    %c128_i32 = arith.constant 128 : i32
    %3 = arith.muli %arg1, %c128_i32 : i32
    %4 = tpu.assume_multiple %3, 128 : i32
    %c0 = arith.constant 0 : index
    %c0_1 = arith.constant 0 : index
    %5 = arith.index_cast %4 : i32 to index
    %6 = vector.load %arg6[%c0, %c0_1, %5] : memref<2x8x512xf32, #tpu.memory_space<vmem>>, vector<1x8x256xf32>
    %7 = vector.shape_cast %6 : vector<1x8x256xf32> to vector<8x256xf32>
    %8 = vector.extract_strided_slice %7 {offsets = [0, 0], sizes = [8, 128], strides = [1, 1]} : vector<8x256xf32> to vector<8x128xf32>
    %9 = vector.extract_strided_slice %7 {offsets = [0, 1], sizes = [8, 128], strides = [1, 1]} : vector<8x256xf32> to vector<8x128xf32>
    %10 = vector.extract_strided_slice %7 {offsets = [0, 2], sizes = [8, 128], strides = [1, 1]} : vector<8x256xf32> to vector<8x128xf32>
    %c1 = arith.constant 1 : index
    %c0_2 = arith.constant 0 : index
    %11 = arith.index_cast %4 : i32 to index
    %12 = vector.load %arg6[%c1, %c0_2, %11] : memref<2x8x512xf32, #tpu.memory_space<vmem>>, vector<1x8x256xf32>
    %13 = vector.shape_cast %12 : vector<1x8x256xf32> to vector<8x256xf32>
    %14 = vector.extract_strided_slice %13 {offsets = [0, 0], sizes = [8, 128], strides = [1, 1]} : vector<8x256xf32> to vector<8x128xf32>
    %15 = vector.extract_strided_slice %13 {offsets = [0, 1], sizes = [8, 128], strides = [1, 1]} : vector<8x256xf32> to vector<8x128xf32>
    %16 = vector.extract_strided_slice %13 {offsets = [0, 2], sizes = [8, 128], strides = [1, 1]} : vector<8x256xf32> to vector<8x128xf32>
    %c0_3 = arith.constant 0 : index
    %17 = memref.load %arg3[%c0_3] : memref<3xf32, #tpu.memory_space<smem>>
    %c0_4 = arith.constant 0 : index
    %18 = memref.load %arg2[%c0_4] : memref<18xf32, #tpu.memory_space<smem>>
    %19 = vector.broadcast %18 : f32 to vector<8x128xf32>
    %20 = arith.mulf %8, %19 : vector<8x128xf32>
    %21 = vector.broadcast %17 : f32 to vector<8x128xf32>
    %22 = arith.addf %21, %20 : vector<8x128xf32>
    %c1_5 = arith.constant 1 : index
    %23 = memref.load %arg2[%c1_5] : memref<18xf32, #tpu.memory_space<smem>>
    %24 = vector.broadcast %23 : f32 to vector<8x128xf32>
    %25 = arith.mulf %9, %24 : vector<8x128xf32>
    %26 = arith.addf %22, %25 : vector<8x128xf32>
    %c2 = arith.constant 2 : index
    %27 = memref.load %arg2[%c2] : memref<18xf32, #tpu.memory_space<smem>>
    %28 = vector.broadcast %27 : f32 to vector<8x128xf32>
    %29 = arith.mulf %10, %28 : vector<8x128xf32>
    %30 = arith.addf %26, %29 : vector<8x128xf32>
    %c3 = arith.constant 3 : index
    %31 = memref.load %arg2[%c3] : memref<18xf32, #tpu.memory_space<smem>>
    %32 = vector.broadcast %31 : f32 to vector<8x128xf32>
    %33 = arith.mulf %14, %32 : vector<8x128xf32>
    %34 = arith.addf %30, %33 : vector<8x128xf32>
    %c4 = arith.constant 4 : index
    %35 = memref.load %arg2[%c4] : memref<18xf32, #tpu.memory_space<smem>>
    %36 = vector.broadcast %35 : f32 to vector<8x128xf32>
    %37 = arith.mulf %15, %36 : vector<8x128xf32>
    %38 = arith.addf %34, %37 : vector<8x128xf32>
    %c5 = arith.constant 5 : index
    %39 = memref.load %arg2[%c5] : memref<18xf32, #tpu.memory_space<smem>>
    %40 = vector.broadcast %39 : f32 to vector<8x128xf32>
    %41 = arith.mulf %16, %40 : vector<8x128xf32>
    %42 = arith.addf %38, %41 : vector<8x128xf32>
    %c0_6 = arith.constant 0 : index
    %c0_7 = arith.constant 0 : index
    %43 = vector.load %arg9[%c0_6, %c0_7] : memref<24x128xf32, #tpu.memory_space<vmem>>, vector<8x128xf32>
    tpu.vector_store %arg9[%c0_6, %c0_7], %42 {strides = array<i32>} : memref<24x128xf32, #tpu.memory_space<vmem>>, vector<8x128xf32>,
    %c1_8 = arith.constant 1 : index
    %44 = memref.load %arg3[%c1_8] : memref<3xf32, #tpu.memory_space<smem>>
    %c6 = arith.constant 6 : index
    %45 = memref.load %arg2[%c6] : memref<18xf32, #tpu.memory_space<smem>>
    %46 = vector.broadcast %45 : f32 to vector<8x128xf32>
    %47 = arith.mulf %8, %46 : vector<8x128xf32>
    %48 = vector.broadcast %44 : f32 to vector<8x128xf32>
    %49 = arith.addf %48, %47 : vector<8x128xf32>
    %c7 = arith.constant 7 : index
    %50 = memref.load %arg2[%c7] : memref<18xf32, #tpu.memory_space<smem>>
    %51 = vector.broadcast %50 : f32 to vector<8x128xf32>
    %52 = arith.mulf %9, %51 : vector<8x128xf32>
    %53 = arith.addf %49, %52 : vector<8x128xf32>
    %c8 = arith.constant 8 : index
    %54 = memref.load %arg2[%c8] : memref<18xf32, #tpu.memory_space<smem>>
    %55 = vector.broadcast %54 : f32 to vector<8x128xf32>
    %56 = arith.mulf %10, %55 : vector<8x128xf32>
    %57 = arith.addf %53, %56 : vector<8x128xf32>
    %c9 = arith.constant 9 : index
    %58 = memref.load %arg2[%c9] : memref<18xf32, #tpu.memory_space<smem>>
    %59 = vector.broadcast %58 : f32 to vector<8x128xf32>
    %60 = arith.mulf %14, %59 : vector<8x128xf32>
    %61 = arith.addf %57, %60 : vector<8x128xf32>
    %c10 = arith.constant 10 : index
    %62 = memref.load %arg2[%c10] : memref<18xf32, #tpu.memory_space<smem>>
    %63 = vector.broadcast %62 : f32 to vector<8x128xf32>
    %64 = arith.mulf %15, %63 : vector<8x128xf32>
    %65 = arith.addf %61, %64 : vector<8x128xf32>
    %c11 = arith.constant 11 : index
    %66 = memref.load %arg2[%c11] : memref<18xf32, #tpu.memory_space<smem>>
    %67 = vector.broadcast %66 : f32 to vector<8x128xf32>
    %68 = arith.mulf %16, %67 : vector<8x128xf32>
    %69 = arith.addf %65, %68 : vector<8x128xf32>
    %c8_9 = arith.constant 8 : index
    %c0_10 = arith.constant 0 : index
    %70 = vector.load %arg9[%c8_9, %c0_10] : memref<24x128xf32, #tpu.memory_space<vmem>>, vector<8x128xf32>
    tpu.vector_store %arg9[%c8_9, %c0_10], %69 {strides = array<i32>} : memref<24x128xf32, #tpu.memory_space<vmem>>, vector<8x128xf32>,
    %c2_11 = arith.constant 2 : index
    %71 = memref.load %arg3[%c2_11] : memref<3xf32, #tpu.memory_space<smem>>
    %c12 = arith.constant 12 : index
    %72 = memref.load %arg2[%c12] : memref<18xf32, #tpu.memory_space<smem>>
    %73 = vector.broadcast %72 : f32 to vector<8x128xf32>
    %74 = arith.mulf %8, %73 : vector<8x128xf32>
    %75 = vector.broadcast %71 : f32 to vector<8x128xf32>
    %76 = arith.addf %75, %74 : vector<8x128xf32>
    %c13 = arith.constant 13 : index
    %77 = memref.load %arg2[%c13] : memref<18xf32, #tpu.memory_space<smem>>
    %78 = vector.broadcast %77 : f32 to vector<8x128xf32>
    %79 = arith.mulf %9, %78 : vector<8x128xf32>
    %80 = arith.addf %76, %79 : vector<8x128xf32>
    %c14 = arith.constant 14 : index
    %81 = memref.load %arg2[%c14] : memref<18xf32, #tpu.memory_space<smem>>
    %82 = vector.broadcast %81 : f32 to vector<8x128xf32>
    %83 = arith.mulf %10, %82 : vector<8x128xf32>
    %84 = arith.addf %80, %83 : vector<8x128xf32>
    %c15 = arith.constant 15 : index
    %85 = memref.load %arg2[%c15] : memref<18xf32, #tpu.memory_space<smem>>
    %86 = vector.broadcast %85 : f32 to vector<8x128xf32>
    %87 = arith.mulf %14, %86 : vector<8x128xf32>
    %88 = arith.addf %84, %87 : vector<8x128xf32>
    %c16 = arith.constant 16 : index
    %89 = memref.load %arg2[%c16] : memref<18xf32, #tpu.memory_space<smem>>
    %90 = vector.broadcast %89 : f32 to vector<8x128xf32>
    %91 = arith.mulf %15, %90 : vector<8x128xf32>
    %92 = arith.addf %88, %91 : vector<8x128xf32>
    %c17 = arith.constant 17 : index
    %93 = memref.load %arg2[%c17] : memref<18xf32, #tpu.memory_space<smem>>
    %94 = vector.broadcast %93 : f32 to vector<8x128xf32>
    %95 = arith.mulf %16, %94 : vector<8x128xf32>
    %96 = arith.addf %92, %95 : vector<8x128xf32>
    %c16_12 = arith.constant 16 : index
    %c0_13 = arith.constant 0 : index
    %97 = vector.load %arg9[%c16_12, %c0_13] : memref<24x128xf32, #tpu.memory_space<vmem>>, vector<8x128xf32>
    tpu.vector_store %arg9[%c16_12, %c0_13], %96 {strides = array<i32>} : memref<24x128xf32, #tpu.memory_space<vmem>>, vector<8x128xf32>,
    %c0_14 = arith.constant 0 : index
    %c0_15 = arith.constant 0 : index
    %98 = vector.load %arg10[%c0_14, %c0_15] : memref<24x768xf32, #tpu.memory_space<vmem>>, vector<24x768xf32>
    %c0_16 = arith.constant 0 : index
    %c0_17 = arith.constant 0 : index
    %99 = vector.load %arg9[%c0_16, %c0_17] : memref<24x128xf32, #tpu.memory_space<vmem>>, vector<24x128xf32>
    %c0_18 = arith.constant 0 : index
    %c0_19 = arith.constant 0 : index
    %100 = vector.load %arg7[%c0_18, %c0_19] : memref<128x768xf32, #tpu.memory_space<vmem>>, vector<128x768xf32>
    %cst = arith.constant dense<0.000000e+00> : vector<24x768xf32>
    %101 = tpu.matmul %99, %100, %cst {dimension_numbers = #tpu.dot_dimension_numbers<[1], [0], [0], [1], [0, 0, 1, 1], [], []>} : vector<24x128xf32>, vector<128x768xf32>, vector<24x768xf32> -> vector<24x768xf32>
    %102 = arith.addf %98, %101 : vector<24x768xf32>
    %c0_20 = arith.constant 0 : index
    %c0_21 = arith.constant 0 : index
    %103 = vector.load %arg10[%c0_20, %c0_21] : memref<24x768xf32, #tpu.memory_space<vmem>>, vector<24x768xf32>
    tpu.vector_store %arg10[%c0_20, %c0_21], %102 {strides = array<i32>} : memref<24x768xf32, #tpu.memory_space<vmem>>, vector<24x768xf32>,
    %c2_i32 = arith.constant 2 : i32
    %104 = arith.cmpi eq, %arg1, %c2_i32 : i32
    %105 = arith.extui %104 : i1 to i32
    %c0_i32_22 = arith.constant 0 : i32
    %106 = arith.cmpi ne, %105, %c0_i32_22 : i32
    scf.if %106 {
      %c0_23 = arith.constant 0 : index
      %107 = memref.load %arg4[%c0_23] : memref<72xf32, #tpu.memory_space<smem>>
      %c0_24 = arith.constant 0 : index
      %c0_25 = arith.constant 0 : index
      %108 = vector.load %arg10[%c0_24, %c0_25] : memref<24x768xf32, #tpu.memory_space<vmem>>, vector<8x256xf32>
      %109 = vector.broadcast %107 : f32 to vector<8x256xf32>
      %110 = arith.mulf %109, %108 : vector<8x256xf32>
      %c1_26 = arith.constant 1 : index
      %111 = memref.load %arg4[%c1_26] : memref<72xf32, #tpu.memory_space<smem>>
      %c0_27 = arith.constant 0 : index
      %c256 = arith.constant 256 : index
      %112 = vector.load %arg10[%c0_27, %c256] : memref<24x768xf32, #tpu.memory_space<vmem>>, vector<8x256xf32>
      %113 = vector.broadcast %111 : f32 to vector<8x256xf32>
      %114 = arith.mulf %113, %112 : vector<8x256xf32>
      %115 = arith.addf %110, %114 : vector<8x256xf32>
      %c2_28 = arith.constant 2 : index
      %116 = memref.load %arg4[%c2_28] : memref<72xf32, #tpu.memory_space<smem>>
      %c0_29 = arith.constant 0 : index
      %c512 = arith.constant 512 : index
      %117 = vector.load %arg10[%c0_29, %c512] : memref<24x768xf32, #tpu.memory_space<vmem>>, vector<8x256xf32>
      %118 = vector.broadcast %116 : f32 to vector<8x256xf32>
      %119 = arith.mulf %118, %117 : vector<8x256xf32>
      %120 = arith.addf %115, %119 : vector<8x256xf32>
      %c3_30 = arith.constant 3 : index
      %121 = memref.load %arg4[%c3_30] : memref<72xf32, #tpu.memory_space<smem>>
      %c8_31 = arith.constant 8 : index
      %c0_32 = arith.constant 0 : index
      %122 = vector.load %arg10[%c8_31, %c0_32] : memref<24x768xf32, #tpu.memory_space<vmem>>, vector<8x256xf32>
      %123 = vector.broadcast %121 : f32 to vector<8x256xf32>
      %124 = arith.mulf %123, %122 : vector<8x256xf32>
      %125 = arith.addf %120, %124 : vector<8x256xf32>
      %c4_33 = arith.constant 4 : index
      %126 = memref.load %arg4[%c4_33] : memref<72xf32, #tpu.memory_space<smem>>
      %c8_34 = arith.constant 8 : index
      %c256_35 = arith.constant 256 : index
      %127 = vector.load %arg10[%c8_34, %c256_35] : memref<24x768xf32, #tpu.memory_space<vmem>>, vector<8x256xf32>
      %128 = vector.broadcast %126 : f32 to vector<8x256xf32>
      %129 = arith.mulf %128, %127 : vector<8x256xf32>
      %130 = arith.addf %125, %129 : vector<8x256xf32>
      %c5_36 = arith.constant 5 : index
      %131 = memref.load %arg4[%c5_36] : memref<72xf32, #tpu.memory_space<smem>>
      %c8_37 = arith.constant 8 : index
      %c512_38 = arith.constant 512 : index
      %132 = vector.load %arg10[%c8_37, %c512_38] : memref<24x768xf32, #tpu.memory_space<vmem>>, vector<8x256xf32>
      %133 = vector.broadcast %131 : f32 to vector<8x256xf32>
      %134 = arith.mulf %133, %132 : vector<8x256xf32>
      %135 = arith.addf %130, %134 : vector<8x256xf32>
      %c6_39 = arith.constant 6 : index
      %136 = memref.load %arg4[%c6_39] : memref<72xf32, #tpu.memory_space<smem>>
      %c16_40 = arith.constant 16 : index
      %c0_41 = arith.constant 0 : index
      %137 = vector.load %arg10[%c16_40, %c0_41] : memref<24x768xf32, #tpu.memory_space<vmem>>, vector<8x256xf32>
      %138 = vector.broadcast %136 : f32 to vector<8x256xf32>
      %139 = arith.mulf %138, %137 : vector<8x256xf32>
      %140 = arith.addf %135, %139 : vector<8x256xf32>
      %c7_42 = arith.constant 7 : index
      %141 = memref.load %arg4[%c7_42] : memref<72xf32, #tpu.memory_space<smem>>
      %c16_43 = arith.constant 16 : index
      %c256_44 = arith.constant 256 : index
      %142 = vector.load %arg10[%c16_43, %c256_44] : memref<24x768xf32, #tpu.memory_space<vmem>>, vector<8x256xf32>
      %143 = vector.broadcast %141 : f32 to vector<8x256xf32>
      %144 = arith.mulf %143, %142 : vector<8x256xf32>
      %145 = arith.addf %140, %144 : vector<8x256xf32>
      %c8_45 = arith.constant 8 : index
      %146 = memref.load %arg4[%c8_45] : memref<72xf32, #tpu.memory_space<smem>>
      %c16_46 = arith.constant 16 : index
      %c512_47 = arith.constant 512 : index
      %147 = vector.load %arg10[%c16_46, %c512_47] : memref<24x768xf32, #tpu.memory_space<vmem>>, vector<8x256xf32>
      %148 = vector.broadcast %146 : f32 to vector<8x256xf32>
      %149 = arith.mulf %148, %147 : vector<8x256xf32>
      %150 = arith.addf %145, %149 : vector<8x256xf32>
      %c0_48 = arith.constant 0 : index
      %151 = memref.load %arg5[%c0_48] : memref<8xf32, #tpu.memory_space<smem>>
      %152 = vector.broadcast %151 : f32 to vector<8x256xf32>
      %153 = arith.addf %150, %152 : vector<8x256xf32>
      %c0_49 = arith.constant 0 : index
      %c0_50 = arith.constant 0 : index
      %c0_51 = arith.constant 0 : index
      %154 = vector.load %arg8[%c0_49, %c0_50, %c0_51] : memref<8x8x256xf32, #tpu.memory_space<vmem>>, vector<1x8x256xf32>
      %155 = vector.shape_cast %154 : vector<1x8x256xf32> to vector<8x256xf32>
      %156 = vector.shape_cast %153 : vector<8x256xf32> to vector<1x8x256xf32>
      tpu.vector_store %arg8[%c0_49, %c0_50, %c0_51], %156 {strides = array<i32>} : memref<8x8x256xf32, #tpu.memory_space<vmem>>, vector<1x8x256xf32>,
      %c9_52 = arith.constant 9 : index
      %157 = memref.load %arg4[%c9_52] : memref<72xf32, #tpu.memory_space<smem>>
      %c0_53 = arith.constant 0 : index
      %c0_54 = arith.constant 0 : index
      %158 = vector.load %arg10[%c0_53, %c0_54] : memref<24x768xf32, #tpu.memory_space<vmem>>, vector<8x256xf32>
      %159 = vector.broadcast %157 : f32 to vector<8x256xf32>
      %160 = arith.mulf %159, %158 : vector<8x256xf32>
      %c10_55 = arith.constant 10 : index
      %161 = memref.load %arg4[%c10_55] : memref<72xf32, #tpu.memory_space<smem>>
      %c0_56 = arith.constant 0 : index
      %c256_57 = arith.constant 256 : index
      %162 = vector.load %arg10[%c0_56, %c256_57] : memref<24x768xf32, #tpu.memory_space<vmem>>, vector<8x256xf32>
      %163 = vector.broadcast %161 : f32 to vector<8x256xf32>
      %164 = arith.mulf %163, %162 : vector<8x256xf32>
      %165 = arith.addf %160, %164 : vector<8x256xf32>
      %c11_58 = arith.constant 11 : index
      %166 = memref.load %arg4[%c11_58] : memref<72xf32, #tpu.memory_space<smem>>
      %c0_59 = arith.constant 0 : index
      %c512_60 = arith.constant 512 : index
      %167 = vector.load %arg10[%c0_59, %c512_60] : memref<24x768xf32, #tpu.memory_space<vmem>>, vector<8x256xf32>
      %168 = vector.broadcast %166 : f32 to vector<8x256xf32>
      %169 = arith.mulf %168, %167 : vector<8x256xf32>
      %170 = arith.addf %165, %169 : vector<8x256xf32>
      %c12_61 = arith.constant 12 : index
      %171 = memref.load %arg4[%c12_61] : memref<72xf32, #tpu.memory_space<smem>>
      %c8_62 = arith.constant 8 : index
      %c0_63 = arith.constant 0 : index
      %172 = vector.load %arg10[%c8_62, %c0_63] : memref<24x768xf32, #tpu.memory_space<vmem>>, vector<8x256xf32>
      %173 = vector.broadcast %171 : f32 to vector<8x256xf32>
      %174 = arith.mulf %173, %172 : vector<8x256xf32>
      %175 = arith.addf %170, %174 : vector<8x256xf32>
      %c13_64 = arith.constant 13 : index
      %176 = memref.load %arg4[%c13_64] : memref<72xf32, #tpu.memory_space<smem>>
      %c8_65 = arith.constant 8 : index
      %c256_66 = arith.constant 256 : index
      %177 = vector.load %arg10[%c8_65, %c256_66] : memref<24x768xf32, #tpu.memory_space<vmem>>, vector<8x256xf32>
      %178 = vector.broadcast %176 : f32 to vector<8x256xf32>
      %179 = arith.mulf %178, %177 : vector<8x256xf32>
      %180 = arith.addf %175, %179 : vector<8x256xf32>
      %c14_67 = arith.constant 14 : index
      %181 = memref.load %arg4[%c14_67] : memref<72xf32, #tpu.memory_space<smem>>
      %c8_68 = arith.constant 8 : index
      %c512_69 = arith.constant 512 : index
      %182 = vector.load %arg10[%c8_68, %c512_69] : memref<24x768xf32, #tpu.memory_space<vmem>>, vector<8x256xf32>
      %183 = vector.broadcast %181 : f32 to vector<8x256xf32>
      %184 = arith.mulf %183, %182 : vector<8x256xf32>
      %185 = arith.addf %180, %184 : vector<8x256xf32>
      %c15_70 = arith.constant 15 : index
      %186 = memref.load %arg4[%c15_70] : memref<72xf32, #tpu.memory_space<smem>>
      %c16_71 = arith.constant 16 : index
      %c0_72 = arith.constant 0 : index
      %187 = vector.load %arg10[%c16_71, %c0_72] : memref<24x768xf32, #tpu.memory_space<vmem>>, vector<8x256xf32>
      %188 = vector.broadcast %186 : f32 to vector<8x256xf32>
      %189 = arith.mulf %188, %187 : vector<8x256xf32>
      %190 = arith.addf %185, %189 : vector<8x256xf32>
      %c16_73 = arith.constant 16 : index
      %191 = memref.load %arg4[%c16_73] : memref<72xf32, #tpu.memory_space<smem>>
      %c16_74 = arith.constant 16 : index
      %c256_75 = arith.constant 256 : index
      %192 = vector.load %arg10[%c16_74, %c256_75] : memref<24x768xf32, #tpu.memory_space<vmem>>, vector<8x256xf32>
      %193 = vector.broadcast %191 : f32 to vector<8x256xf32>
      %194 = arith.mulf %193, %192 : vector<8x256xf32>
      %195 = arith.addf %190, %194 : vector<8x256xf32>
      %c17_76 = arith.constant 17 : index
      %196 = memref.load %arg4[%c17_76] : memref<72xf32, #tpu.memory_space<smem>>
      %c16_77 = arith.constant 16 : index
      %c512_78 = arith.constant 512 : index
      %197 = vector.load %arg10[%c16_77, %c512_78] : memref<24x768xf32, #tpu.memory_space<vmem>>, vector<8x256xf32>
      %198 = vector.broadcast %196 : f32 to vector<8x256xf32>
      %199 = arith.mulf %198, %197 : vector<8x256xf32>
      %200 = arith.addf %195, %199 : vector<8x256xf32>
      %c1_79 = arith.constant 1 : index
      %201 = memref.load %arg5[%c1_79] : memref<8xf32, #tpu.memory_space<smem>>
      %202 = vector.broadcast %201 : f32 to vector<8x256xf32>
      %203 = arith.addf %200, %202 : vector<8x256xf32>
      %c1_80 = arith.constant 1 : index
      %c0_81 = arith.constant 0 : index
      %c0_82 = arith.constant 0 : index
      %204 = vector.load %arg8[%c1_80, %c0_81, %c0_82] : memref<8x8x256xf32, #tpu.memory_space<vmem>>, vector<1x8x256xf32>
      %205 = vector.shape_cast %204 : vector<1x8x256xf32> to vector<8x256xf32>
      %206 = vector.shape_cast %203 : vector<8x256xf32> to vector<1x8x256xf32>
      tpu.vector_store %arg8[%c1_80, %c0_81, %c0_82], %206 {strides = array<i32>} : memref<8x8x256xf32, #tpu.memory_space<vmem>>, vector<1x8x256xf32>,
      %c18 = arith.constant 18 : index
      %207 = memref.load %arg4[%c18] : memref<72xf32, #tpu.memory_space<smem>>
      %c0_83 = arith.constant 0 : index
      %c0_84 = arith.constant 0 : index
      %208 = vector.load %arg10[%c0_83, %c0_84] : memref<24x768xf32, #tpu.memory_space<vmem>>, vector<8x256xf32>
      %209 = vector.broadcast %207 : f32 to vector<8x256xf32>
      %210 = arith.mulf %209, %208 : vector<8x256xf32>
      %c19 = arith.constant 19 : index
      %211 = memref.load %arg4[%c19] : memref<72xf32, #tpu.memory_space<smem>>
      %c0_85 = arith.constant 0 : index
      %c256_86 = arith.constant 256 : index
      %212 = vector.load %arg10[%c0_85, %c256_86] : memref<24x768xf32, #tpu.memory_space<vmem>>, vector<8x256xf32>
      %213 = vector.broadcast %211 : f32 to vector<8x256xf32>
      %214 = arith.mulf %213, %212 : vector<8x256xf32>
      %215 = arith.addf %210, %214 : vector<8x256xf32>
      %c20 = arith.constant 20 : index
      %216 = memref.load %arg4[%c20] : memref<72xf32, #tpu.memory_space<smem>>
      %c0_87 = arith.constant 0 : index
      %c512_88 = arith.constant 512 : index
      %217 = vector.load %arg10[%c0_87, %c512_88] : memref<24x768xf32, #tpu.memory_space<vmem>>, vector<8x256xf32>
      %218 = vector.broadcast %216 : f32 to vector<8x256xf32>
      %219 = arith.mulf %218, %217 : vector<8x256xf32>
      %220 = arith.addf %215, %219 : vector<8x256xf32>
      %c21 = arith.constant 21 : index
      %221 = memref.load %arg4[%c21] : memref<72xf32, #tpu.memory_space<smem>>
      %c8_89 = arith.constant 8 : index
      %c0_90 = arith.constant 0 : index
      %222 = vector.load %arg10[%c8_89, %c0_90] : memref<24x768xf32, #tpu.memory_space<vmem>>, vector<8x256xf32>
      %223 = vector.broadcast %221 : f32 to vector<8x256xf32>
      %224 = arith.mulf %223, %222 : vector<8x256xf32>
      %225 = arith.addf %220, %224 : vector<8x256xf32>
      %c22 = arith.constant 22 : index
      %226 = memref.load %arg4[%c22] : memref<72xf32, #tpu.memory_space<smem>>
      %c8_91 = arith.constant 8 : index
      %c256_92 = arith.constant 256 : index
      %227 = vector.load %arg10[%c8_91, %c256_92] : memref<24x768xf32, #tpu.memory_space<vmem>>, vector<8x256xf32>
      %228 = vector.broadcast %226 : f32 to vector<8x256xf32>
      %229 = arith.mulf %228, %227 : vector<8x256xf32>
      %230 = arith.addf %225, %229 : vector<8x256xf32>
      %c23 = arith.constant 23 : index
      %231 = memref.load %arg4[%c23] : memref<72xf32, #tpu.memory_space<smem>>
      %c8_93 = arith.constant 8 : index
      %c512_94 = arith.constant 512 : index
      %232 = vector.load %arg10[%c8_93, %c512_94] : memref<24x768xf32, #tpu.memory_space<vmem>>, vector<8x256xf32>
      %233 = vector.broadcast %231 : f32 to vector<8x256xf32>
      %234 = arith.mulf %233, %232 : vector<8x256xf32>
      %235 = arith.addf %230, %234 : vector<8x256xf32>
      %c24 = arith.constant 24 : index
      %236 = memref.load %arg4[%c24] : memref<72xf32, #tpu.memory_space<smem>>
      %c16_95 = arith.constant 16 : index
      %c0_96 = arith.constant 0 : index
      %237 = vector.load %arg10[%c16_95, %c0_96] : memref<24x768xf32, #tpu.memory_space<vmem>>, vector<8x256xf32>
      %238 = vector.broadcast %236 : f32 to vector<8x256xf32>
      %239 = arith.mulf %238, %237 : vector<8x256xf32>
      %240 = arith.addf %235, %239 : vector<8x256xf32>
      %c25 = arith.constant 25 : index
      %241 = memref.load %arg4[%c25] : memref<72xf32, #tpu.memory_space<smem>>
      %c16_97 = arith.constant 16 : index
      %c256_98 = arith.constant 256 : index
      %242 = vector.load %arg10[%c16_97, %c256_98] : memref<24x768xf32, #tpu.memory_space<vmem>>, vector<8x256xf32>
      %243 = vector.broadcast %241 : f32 to vector<8x256xf32>
      %244 = arith.mulf %243, %242 : vector<8x256xf32>
      %245 = arith.addf %240, %244 : vector<8x256xf32>
      %c26 = arith.constant 26 : index
      %246 = memref.load %arg4[%c26] : memref<72xf32, #tpu.memory_space<smem>>
      %c16_99 = arith.constant 16 : index
      %c512_100 = arith.constant 512 : index
      %247 = vector.load %arg10[%c16_99, %c512_100] : memref<24x768xf32, #tpu.memory_space<vmem>>, vector<8x256xf32>
      %248 = vector.broadcast %246 : f32 to vector<8x256xf32>
      %249 = arith.mulf %248, %247 : vector<8x256xf32>
      %250 = arith.addf %245, %249 : vector<8x256xf32>
      %c2_101 = arith.constant 2 : index
      %251 = memref.load %arg5[%c2_101] : memref<8xf32, #tpu.memory_space<smem>>
      %252 = vector.broadcast %251 : f32 to vector<8x256xf32>
      %253 = arith.addf %250, %252 : vector<8x256xf32>
      %c2_102 = arith.constant 2 : index
      %c0_103 = arith.constant 0 : index
      %c0_104 = arith.constant 0 : index
      %254 = vector.load %arg8[%c2_102, %c0_103, %c0_104] : memref<8x8x256xf32, #tpu.memory_space<vmem>>, vector<1x8x256xf32>
      %255 = vector.shape_cast %254 : vector<1x8x256xf32> to vector<8x256xf32>
      %256 = vector.shape_cast %253 : vector<8x256xf32> to vector<1x8x256xf32>
      tpu.vector_store %arg8[%c2_102, %c0_103, %c0_104], %256 {strides = array<i32>} : memref<8x8x256xf32, #tpu.memory_space<vmem>>, vector<1x8x256xf32>,
      %c27 = arith.constant 27 : index
      %257 = memref.load %arg4[%c27] : memref<72xf32, #tpu.memory_space<smem>>
      %c0_105 = arith.constant 0 : index
      %c0_106 = arith.constant 0 : index
      %258 = vector.load %arg10[%c0_105, %c0_106] : memref<24x768xf32, #tpu.memory_space<vmem>>, vector<8x256xf32>
      %259 = vector.broadcast %257 : f32 to vector<8x256xf32>
      %260 = arith.mulf %259, %258 : vector<8x256xf32>
      %c28 = arith.constant 28 : index
      %261 = memref.load %arg4[%c28] : memref<72xf32, #tpu.memory_space<smem>>
      %c0_107 = arith.constant 0 : index
      %c256_108 = arith.constant 256 : index
      %262 = vector.load %arg10[%c0_107, %c256_108] : memref<24x768xf32, #tpu.memory_space<vmem>>, vector<8x256xf32>
      %263 = vector.broadcast %261 : f32 to vector<8x256xf32>
      %264 = arith.mulf %263, %262 : vector<8x256xf32>
      %265 = arith.addf %260, %264 : vector<8x256xf32>
      %c29 = arith.constant 29 : index
      %266 = memref.load %arg4[%c29] : memref<72xf32, #tpu.memory_space<smem>>
      %c0_109 = arith.constant 0 : index
      %c512_110 = arith.constant 512 : index
      %267 = vector.load %arg10[%c0_109, %c512_110] : memref<24x768xf32, #tpu.memory_space<vmem>>, vector<8x256xf32>
      %268 = vector.broadcast %266 : f32 to vector<8x256xf32>
      %269 = arith.mulf %268, %267 : vector<8x256xf32>
      %270 = arith.addf %265, %269 : vector<8x256xf32>
      %c30 = arith.constant 30 : index
      %271 = memref.load %arg4[%c30] : memref<72xf32, #tpu.memory_space<smem>>
      %c8_111 = arith.constant 8 : index
      %c0_112 = arith.constant 0 : index
      %272 = vector.load %arg10[%c8_111, %c0_112] : memref<24x768xf32, #tpu.memory_space<vmem>>, vector<8x256xf32>
      %273 = vector.broadcast %271 : f32 to vector<8x256xf32>
      %274 = arith.mulf %273, %272 : vector<8x256xf32>
      %275 = arith.addf %270, %274 : vector<8x256xf32>
      %c31 = arith.constant 31 : index
      %276 = memref.load %arg4[%c31] : memref<72xf32, #tpu.memory_space<smem>>
      %c8_113 = arith.constant 8 : index
      %c256_114 = arith.constant 256 : index
      %277 = vector.load %arg10[%c8_113, %c256_114] : memref<24x768xf32, #tpu.memory_space<vmem>>, vector<8x256xf32>
      %278 = vector.broadcast %276 : f32 to vector<8x256xf32>
      %279 = arith.mulf %278, %277 : vector<8x256xf32>
      %280 = arith.addf %275, %279 : vector<8x256xf32>
      %c32 = arith.constant 32 : index
      %281 = memref.load %arg4[%c32] : memref<72xf32, #tpu.memory_space<smem>>
      %c8_115 = arith.constant 8 : index
      %c512_116 = arith.constant 512 : index
      %282 = vector.load %arg10[%c8_115, %c512_116] : memref<24x768xf32, #tpu.memory_space<vmem>>, vector<8x256xf32>
      %283 = vector.broadcast %281 : f32 to vector<8x256xf32>
      %284 = arith.mulf %283, %282 : vector<8x256xf32>
      %285 = arith.addf %280, %284 : vector<8x256xf32>
      %c33 = arith.constant 33 : index
      %286 = memref.load %arg4[%c33] : memref<72xf32, #tpu.memory_space<smem>>
      %c16_117 = arith.constant 16 : index
      %c0_118 = arith.constant 0 : index
      %287 = vector.load %arg10[%c16_117, %c0_118] : memref<24x768xf32, #tpu.memory_space<vmem>>, vector<8x256xf32>
      %288 = vector.broadcast %286 : f32 to vector<8x256xf32>
      %289 = arith.mulf %288, %287 : vector<8x256xf32>
      %290 = arith.addf %285, %289 : vector<8x256xf32>
      %c34 = arith.constant 34 : index
      %291 = memref.load %arg4[%c34] : memref<72xf32, #tpu.memory_space<smem>>
      %c16_119 = arith.constant 16 : index
      %c256_120 = arith.constant 256 : index
      %292 = vector.load %arg10[%c16_119, %c256_120] : memref<24x768xf32, #tpu.memory_space<vmem>>, vector<8x256xf32>
      %293 = vector.broadcast %291 : f32 to vector<8x256xf32>
      %294 = arith.mulf %293, %292 : vector<8x256xf32>
      %295 = arith.addf %290, %294 : vector<8x256xf32>
      %c35 = arith.constant 35 : index
      %296 = memref.load %arg4[%c35] : memref<72xf32, #tpu.memory_space<smem>>
      %c16_121 = arith.constant 16 : index
      %c512_122 = arith.constant 512 : index
      %297 = vector.load %arg10[%c16_121, %c512_122] : memref<24x768xf32, #tpu.memory_space<vmem>>, vector<8x256xf32>
      %298 = vector.broadcast %296 : f32 to vector<8x256xf32>
      %299 = arith.mulf %298, %297 : vector<8x256xf32>
      %300 = arith.addf %295, %299 : vector<8x256xf32>
      %c3_123 = arith.constant 3 : index
      %301 = memref.load %arg5[%c3_123] : memref<8xf32, #tpu.memory_space<smem>>
      %302 = vector.broadcast %301 : f32 to vector<8x256xf32>
      %303 = arith.addf %300, %302 : vector<8x256xf32>
      %c3_124 = arith.constant 3 : index
      %c0_125 = arith.constant 0 : index
      %c0_126 = arith.constant 0 : index
      %304 = vector.load %arg8[%c3_124, %c0_125, %c0_126] : memref<8x8x256xf32, #tpu.memory_space<vmem>>, vector<1x8x256xf32>
      %305 = vector.shape_cast %304 : vector<1x8x256xf32> to vector<8x256xf32>
      %306 = vector.shape_cast %303 : vector<8x256xf32> to vector<1x8x256xf32>
      tpu.vector_store %arg8[%c3_124, %c0_125, %c0_126], %306 {strides = array<i32>} : memref<8x8x256xf32, #tpu.memory_space<vmem>>, vector<1x8x256xf32>,
      %c36 = arith.constant 36 : index
      %307 = memref.load %arg4[%c36] : memref<72xf32, #tpu.memory_space<smem>>
      %c0_127 = arith.constant 0 : index
      %c0_128 = arith.constant 0 : index
      %308 = vector.load %arg10[%c0_127, %c0_128] : memref<24x768xf32, #tpu.memory_space<vmem>>, vector<8x256xf32>
      %309 = vector.broadcast %307 : f32 to vector<8x256xf32>
      %310 = arith.mulf %309, %308 : vector<8x256xf32>
      %c37 = arith.constant 37 : index
      %311 = memref.load %arg4[%c37] : memref<72xf32, #tpu.memory_space<smem>>
      %c0_129 = arith.constant 0 : index
      %c256_130 = arith.constant 256 : index
      %312 = vector.load %arg10[%c0_129, %c256_130] : memref<24x768xf32, #tpu.memory_space<vmem>>, vector<8x256xf32>
      %313 = vector.broadcast %311 : f32 to vector<8x256xf32>
      %314 = arith.mulf %313, %312 : vector<8x256xf32>
      %315 = arith.addf %310, %314 : vector<8x256xf32>
      %c38 = arith.constant 38 : index
      %316 = memref.load %arg4[%c38] : memref<72xf32, #tpu.memory_space<smem>>
      %c0_131 = arith.constant 0 : index
      %c512_132 = arith.constant 512 : index
      %317 = vector.load %arg10[%c0_131, %c512_132] : memref<24x768xf32, #tpu.memory_space<vmem>>, vector<8x256xf32>
      %318 = vector.broadcast %316 : f32 to vector<8x256xf32>
      %319 = arith.mulf %318, %317 : vector<8x256xf32>
      %320 = arith.addf %315, %319 : vector<8x256xf32>
      %c39 = arith.constant 39 : index
      %321 = memref.load %arg4[%c39] : memref<72xf32, #tpu.memory_space<smem>>
      %c8_133 = arith.constant 8 : index
      %c0_134 = arith.constant 0 : index
      %322 = vector.load %arg10[%c8_133, %c0_134] : memref<24x768xf32, #tpu.memory_space<vmem>>, vector<8x256xf32>
      %323 = vector.broadcast %321 : f32 to vector<8x256xf32>
      %324 = arith.mulf %323, %322 : vector<8x256xf32>
      %325 = arith.addf %320, %324 : vector<8x256xf32>
      %c40 = arith.constant 40 : index
      %326 = memref.load %arg4[%c40] : memref<72xf32, #tpu.memory_space<smem>>
      %c8_135 = arith.constant 8 : index
      %c256_136 = arith.constant 256 : index
      %327 = vector.load %arg10[%c8_135, %c256_136] : memref<24x768xf32, #tpu.memory_space<vmem>>, vector<8x256xf32>
      %328 = vector.broadcast %326 : f32 to vector<8x256xf32>
      %329 = arith.mulf %328, %327 : vector<8x256xf32>
      %330 = arith.addf %325, %329 : vector<8x256xf32>
      %c41 = arith.constant 41 : index
      %331 = memref.load %arg4[%c41] : memref<72xf32, #tpu.memory_space<smem>>
      %c8_137 = arith.constant 8 : index
      %c512_138 = arith.constant 512 : index
      %332 = vector.load %arg10[%c8_137, %c512_138] : memref<24x768xf32, #tpu.memory_space<vmem>>, vector<8x256xf32>
      %333 = vector.broadcast %331 : f32 to vector<8x256xf32>
      %334 = arith.mulf %333, %332 : vector<8x256xf32>
      %335 = arith.addf %330, %334 : vector<8x256xf32>
      %c42 = arith.constant 42 : index
      %336 = memref.load %arg4[%c42] : memref<72xf32, #tpu.memory_space<smem>>
      %c16_139 = arith.constant 16 : index
      %c0_140 = arith.constant 0 : index
      %337 = vector.load %arg10[%c16_139, %c0_140] : memref<24x768xf32, #tpu.memory_space<vmem>>, vector<8x256xf32>
      %338 = vector.broadcast %336 : f32 to vector<8x256xf32>
      %339 = arith.mulf %338, %337 : vector<8x256xf32>
      %340 = arith.addf %335, %339 : vector<8x256xf32>
      %c43 = arith.constant 43 : index
      %341 = memref.load %arg4[%c43] : memref<72xf32, #tpu.memory_space<smem>>
      %c16_141 = arith.constant 16 : index
      %c256_142 = arith.constant 256 : index
      %342 = vector.load %arg10[%c16_141, %c256_142] : memref<24x768xf32, #tpu.memory_space<vmem>>, vector<8x256xf32>
      %343 = vector.broadcast %341 : f32 to vector<8x256xf32>
      %344 = arith.mulf %343, %342 : vector<8x256xf32>
      %345 = arith.addf %340, %344 : vector<8x256xf32>
      %c44 = arith.constant 44 : index
      %346 = memref.load %arg4[%c44] : memref<72xf32, #tpu.memory_space<smem>>
      %c16_143 = arith.constant 16 : index
      %c512_144 = arith.constant 512 : index
      %347 = vector.load %arg10[%c16_143, %c512_144] : memref<24x768xf32, #tpu.memory_space<vmem>>, vector<8x256xf32>
      %348 = vector.broadcast %346 : f32 to vector<8x256xf32>
      %349 = arith.mulf %348, %347 : vector<8x256xf32>
      %350 = arith.addf %345, %349 : vector<8x256xf32>
      %c4_145 = arith.constant 4 : index
      %351 = memref.load %arg5[%c4_145] : memref<8xf32, #tpu.memory_space<smem>>
      %352 = vector.broadcast %351 : f32 to vector<8x256xf32>
      %353 = arith.addf %350, %352 : vector<8x256xf32>
      %c4_146 = arith.constant 4 : index
      %c0_147 = arith.constant 0 : index
      %c0_148 = arith.constant 0 : index
      %354 = vector.load %arg8[%c4_146, %c0_147, %c0_148] : memref<8x8x256xf32, #tpu.memory_space<vmem>>, vector<1x8x256xf32>
      %355 = vector.shape_cast %354 : vector<1x8x256xf32> to vector<8x256xf32>
      %356 = vector.shape_cast %353 : vector<8x256xf32> to vector<1x8x256xf32>
      tpu.vector_store %arg8[%c4_146, %c0_147, %c0_148], %356 {strides = array<i32>} : memref<8x8x256xf32, #tpu.memory_space<vmem>>, vector<1x8x256xf32>,
      %c45 = arith.constant 45 : index
      %357 = memref.load %arg4[%c45] : memref<72xf32, #tpu.memory_space<smem>>
      %c0_149 = arith.constant 0 : index
      %c0_150 = arith.constant 0 : index
      %358 = vector.load %arg10[%c0_149, %c0_150] : memref<24x768xf32, #tpu.memory_space<vmem>>, vector<8x256xf32>
      %359 = vector.broadcast %357 : f32 to vector<8x256xf32>
      %360 = arith.mulf %359, %358 : vector<8x256xf32>
      %c46 = arith.constant 46 : index
      %361 = memref.load %arg4[%c46] : memref<72xf32, #tpu.memory_space<smem>>
      %c0_151 = arith.constant 0 : index
      %c256_152 = arith.constant 256 : index
      %362 = vector.load %arg10[%c0_151, %c256_152] : memref<24x768xf32, #tpu.memory_space<vmem>>, vector<8x256xf32>
      %363 = vector.broadcast %361 : f32 to vector<8x256xf32>
      %364 = arith.mulf %363, %362 : vector<8x256xf32>
      %365 = arith.addf %360, %364 : vector<8x256xf32>
      %c47 = arith.constant 47 : index
      %366 = memref.load %arg4[%c47] : memref<72xf32, #tpu.memory_space<smem>>
      %c0_153 = arith.constant 0 : index
      %c512_154 = arith.constant 512 : index
      %367 = vector.load %arg10[%c0_153, %c512_154] : memref<24x768xf32, #tpu.memory_space<vmem>>, vector<8x256xf32>
      %368 = vector.broadcast %366 : f32 to vector<8x256xf32>
      %369 = arith.mulf %368, %367 : vector<8x256xf32>
      %370 = arith.addf %365, %369 : vector<8x256xf32>
      %c48 = arith.constant 48 : index
      %371 = memref.load %arg4[%c48] : memref<72xf32, #tpu.memory_space<smem>>
      %c8_155 = arith.constant 8 : index
      %c0_156 = arith.constant 0 : index
      %372 = vector.load %arg10[%c8_155, %c0_156] : memref<24x768xf32, #tpu.memory_space<vmem>>, vector<8x256xf32>
      %373 = vector.broadcast %371 : f32 to vector<8x256xf32>
      %374 = arith.mulf %373, %372 : vector<8x256xf32>
      %375 = arith.addf %370, %374 : vector<8x256xf32>
      %c49 = arith.constant 49 : index
      %376 = memref.load %arg4[%c49] : memref<72xf32, #tpu.memory_space<smem>>
      %c8_157 = arith.constant 8 : index
      %c256_158 = arith.constant 256 : index
      %377 = vector.load %arg10[%c8_157, %c256_158] : memref<24x768xf32, #tpu.memory_space<vmem>>, vector<8x256xf32>
      %378 = vector.broadcast %376 : f32 to vector<8x256xf32>
      %379 = arith.mulf %378, %377 : vector<8x256xf32>
      %380 = arith.addf %375, %379 : vector<8x256xf32>
      %c50 = arith.constant 50 : index
      %381 = memref.load %arg4[%c50] : memref<72xf32, #tpu.memory_space<smem>>
      %c8_159 = arith.constant 8 : index
      %c512_160 = arith.constant 512 : index
      %382 = vector.load %arg10[%c8_159, %c512_160] : memref<24x768xf32, #tpu.memory_space<vmem>>, vector<8x256xf32>
      %383 = vector.broadcast %381 : f32 to vector<8x256xf32>
      %384 = arith.mulf %383, %382 : vector<8x256xf32>
      %385 = arith.addf %380, %384 : vector<8x256xf32>
      %c51 = arith.constant 51 : index
      %386 = memref.load %arg4[%c51] : memref<72xf32, #tpu.memory_space<smem>>
      %c16_161 = arith.constant 16 : index
      %c0_162 = arith.constant 0 : index
      %387 = vector.load %arg10[%c16_161, %c0_162] : memref<24x768xf32, #tpu.memory_space<vmem>>, vector<8x256xf32>
      %388 = vector.broadcast %386 : f32 to vector<8x256xf32>
      %389 = arith.mulf %388, %387 : vector<8x256xf32>
      %390 = arith.addf %385, %389 : vector<8x256xf32>
      %c52 = arith.constant 52 : index
      %391 = memref.load %arg4[%c52] : memref<72xf32, #tpu.memory_space<smem>>
      %c16_163 = arith.constant 16 : index
      %c256_164 = arith.constant 256 : index
      %392 = vector.load %arg10[%c16_163, %c256_164] : memref<24x768xf32, #tpu.memory_space<vmem>>, vector<8x256xf32>
      %393 = vector.broadcast %391 : f32 to vector<8x256xf32>
      %394 = arith.mulf %393, %392 : vector<8x256xf32>
      %395 = arith.addf %390, %394 : vector<8x256xf32>
      %c53 = arith.constant 53 : index
      %396 = memref.load %arg4[%c53] : memref<72xf32, #tpu.memory_space<smem>>
      %c16_165 = arith.constant 16 : index
      %c512_166 = arith.constant 512 : index
      %397 = vector.load %arg10[%c16_165, %c512_166] : memref<24x768xf32, #tpu.memory_space<vmem>>, vector<8x256xf32>
      %398 = vector.broadcast %396 : f32 to vector<8x256xf32>
      %399 = arith.mulf %398, %397 : vector<8x256xf32>
      %400 = arith.addf %395, %399 : vector<8x256xf32>
      %c5_167 = arith.constant 5 : index
      %401 = memref.load %arg5[%c5_167] : memref<8xf32, #tpu.memory_space<smem>>
      %402 = vector.broadcast %401 : f32 to vector<8x256xf32>
      %403 = arith.addf %400, %402 : vector<8x256xf32>
      %c5_168 = arith.constant 5 : index
      %c0_169 = arith.constant 0 : index
      %c0_170 = arith.constant 0 : index
      %404 = vector.load %arg8[%c5_168, %c0_169, %c0_170] : memref<8x8x256xf32, #tpu.memory_space<vmem>>, vector<1x8x256xf32>
      %405 = vector.shape_cast %404 : vector<1x8x256xf32> to vector<8x256xf32>
      %406 = vector.shape_cast %403 : vector<8x256xf32> to vector<1x8x256xf32>
      tpu.vector_store %arg8[%c5_168, %c0_169, %c0_170], %406 {strides = array<i32>} : memref<8x8x256xf32, #tpu.memory_space<vmem>>, vector<1x8x256xf32>,
      %c54 = arith.constant 54 : index
      %407 = memref.load %arg4[%c54] : memref<72xf32, #tpu.memory_space<smem>>
      %c0_171 = arith.constant 0 : index
      %c0_172 = arith.constant 0 : index
      %408 = vector.load %arg10[%c0_171, %c0_172] : memref<24x768xf32, #tpu.memory_space<vmem>>, vector<8x256xf32>
      %409 = vector.broadcast %407 : f32 to vector<8x256xf32>
      %410 = arith.mulf %409, %408 : vector<8x256xf32>
      %c55 = arith.constant 55 : index
      %411 = memref.load %arg4[%c55] : memref<72xf32, #tpu.memory_space<smem>>
      %c0_173 = arith.constant 0 : index
      %c256_174 = arith.constant 256 : index
      %412 = vector.load %arg10[%c0_173, %c256_174] : memref<24x768xf32, #tpu.memory_space<vmem>>, vector<8x256xf32>
      %413 = vector.broadcast %411 : f32 to vector<8x256xf32>
      %414 = arith.mulf %413, %412 : vector<8x256xf32>
      %415 = arith.addf %410, %414 : vector<8x256xf32>
      %c56 = arith.constant 56 : index
      %416 = memref.load %arg4[%c56] : memref<72xf32, #tpu.memory_space<smem>>
      %c0_175 = arith.constant 0 : index
      %c512_176 = arith.constant 512 : index
      %417 = vector.load %arg10[%c0_175, %c512_176] : memref<24x768xf32, #tpu.memory_space<vmem>>, vector<8x256xf32>
      %418 = vector.broadcast %416 : f32 to vector<8x256xf32>
      %419 = arith.mulf %418, %417 : vector<8x256xf32>
      %420 = arith.addf %415, %419 : vector<8x256xf32>
      %c57 = arith.constant 57 : index
      %421 = memref.load %arg4[%c57] : memref<72xf32, #tpu.memory_space<smem>>
      %c8_177 = arith.constant 8 : index
      %c0_178 = arith.constant 0 : index
      %422 = vector.load %arg10[%c8_177, %c0_178] : memref<24x768xf32, #tpu.memory_space<vmem>>, vector<8x256xf32>
      %423 = vector.broadcast %421 : f32 to vector<8x256xf32>
      %424 = arith.mulf %423, %422 : vector<8x256xf32>
      %425 = arith.addf %420, %424 : vector<8x256xf32>
      %c58 = arith.constant 58 : index
      %426 = memref.load %arg4[%c58] : memref<72xf32, #tpu.memory_space<smem>>
      %c8_179 = arith.constant 8 : index
      %c256_180 = arith.constant 256 : index
      %427 = vector.load %arg10[%c8_179, %c256_180] : memref<24x768xf32, #tpu.memory_space<vmem>>, vector<8x256xf32>
      %428 = vector.broadcast %426 : f32 to vector<8x256xf32>
      %429 = arith.mulf %428, %427 : vector<8x256xf32>
      %430 = arith.addf %425, %429 : vector<8x256xf32>
      %c59 = arith.constant 59 : index
      %431 = memref.load %arg4[%c59] : memref<72xf32, #tpu.memory_space<smem>>
      %c8_181 = arith.constant 8 : index
      %c512_182 = arith.constant 512 : index
      %432 = vector.load %arg10[%c8_181, %c512_182] : memref<24x768xf32, #tpu.memory_space<vmem>>, vector<8x256xf32>
      %433 = vector.broadcast %431 : f32 to vector<8x256xf32>
      %434 = arith.mulf %433, %432 : vector<8x256xf32>
      %435 = arith.addf %430, %434 : vector<8x256xf32>
      %c60 = arith.constant 60 : index
      %436 = memref.load %arg4[%c60] : memref<72xf32, #tpu.memory_space<smem>>
      %c16_183 = arith.constant 16 : index
      %c0_184 = arith.constant 0 : index
      %437 = vector.load %arg10[%c16_183, %c0_184] : memref<24x768xf32, #tpu.memory_space<vmem>>, vector<8x256xf32>
      %438 = vector.broadcast %436 : f32 to vector<8x256xf32>
      %439 = arith.mulf %438, %437 : vector<8x256xf32>
      %440 = arith.addf %435, %439 : vector<8x256xf32>
      %c61 = arith.constant 61 : index
      %441 = memref.load %arg4[%c61] : memref<72xf32, #tpu.memory_space<smem>>
      %c16_185 = arith.constant 16 : index
      %c256_186 = arith.constant 256 : index
      %442 = vector.load %arg10[%c16_185, %c256_186] : memref<24x768xf32, #tpu.memory_space<vmem>>, vector<8x256xf32>
      %443 = vector.broadcast %441 : f32 to vector<8x256xf32>
      %444 = arith.mulf %443, %442 : vector<8x256xf32>
      %445 = arith.addf %440, %444 : vector<8x256xf32>
      %c62 = arith.constant 62 : index
      %446 = memref.load %arg4[%c62] : memref<72xf32, #tpu.memory_space<smem>>
      %c16_187 = arith.constant 16 : index
      %c512_188 = arith.constant 512 : index
      %447 = vector.load %arg10[%c16_187, %c512_188] : memref<24x768xf32, #tpu.memory_space<vmem>>, vector<8x256xf32>
      %448 = vector.broadcast %446 : f32 to vector<8x256xf32>
      %449 = arith.mulf %448, %447 : vector<8x256xf32>
      %450 = arith.addf %445, %449 : vector<8x256xf32>
      %c6_189 = arith.constant 6 : index
      %451 = memref.load %arg5[%c6_189] : memref<8xf32, #tpu.memory_space<smem>>
      %452 = vector.broadcast %451 : f32 to vector<8x256xf32>
      %453 = arith.addf %450, %452 : vector<8x256xf32>
      %c6_190 = arith.constant 6 : index
      %c0_191 = arith.constant 0 : index
      %c0_192 = arith.constant 0 : index
      %454 = vector.load %arg8[%c6_190, %c0_191, %c0_192] : memref<8x8x256xf32, #tpu.memory_space<vmem>>, vector<1x8x256xf32>
      %455 = vector.shape_cast %454 : vector<1x8x256xf32> to vector<8x256xf32>
      %456 = vector.shape_cast %453 : vector<8x256xf32> to vector<1x8x256xf32>
      tpu.vector_store %arg8[%c6_190, %c0_191, %c0_192], %456 {strides = array<i32>} : memref<8x8x256xf32, #tpu.memory_space<vmem>>, vector<1x8x256xf32>,
      %c63 = arith.constant 63 : index
      %457 = memref.load %arg4[%c63] : memref<72xf32, #tpu.memory_space<smem>>
      %c0_193 = arith.constant 0 : index
      %c0_194 = arith.constant 0 : index
      %458 = vector.load %arg10[%c0_193, %c0_194] : memref<24x768xf32, #tpu.memory_space<vmem>>, vector<8x256xf32>
      %459 = vector.broadcast %457 : f32 to vector<8x256xf32>
      %460 = arith.mulf %459, %458 : vector<8x256xf32>
      %c64 = arith.constant 64 : index
      %461 = memref.load %arg4[%c64] : memref<72xf32, #tpu.memory_space<smem>>
      %c0_195 = arith.constant 0 : index
      %c256_196 = arith.constant 256 : index
      %462 = vector.load %arg10[%c0_195, %c256_196] : memref<24x768xf32, #tpu.memory_space<vmem>>, vector<8x256xf32>
      %463 = vector.broadcast %461 : f32 to vector<8x256xf32>
      %464 = arith.mulf %463, %462 : vector<8x256xf32>
      %465 = arith.addf %460, %464 : vector<8x256xf32>
      %c65 = arith.constant 65 : index
      %466 = memref.load %arg4[%c65] : memref<72xf32, #tpu.memory_space<smem>>
      %c0_197 = arith.constant 0 : index
      %c512_198 = arith.constant 512 : index
      %467 = vector.load %arg10[%c0_197, %c512_198] : memref<24x768xf32, #tpu.memory_space<vmem>>, vector<8x256xf32>
      %468 = vector.broadcast %466 : f32 to vector<8x256xf32>
      %469 = arith.mulf %468, %467 : vector<8x256xf32>
      %470 = arith.addf %465, %469 : vector<8x256xf32>
      %c66 = arith.constant 66 : index
      %471 = memref.load %arg4[%c66] : memref<72xf32, #tpu.memory_space<smem>>
      %c8_199 = arith.constant 8 : index
      %c0_200 = arith.constant 0 : index
      %472 = vector.load %arg10[%c8_199, %c0_200] : memref<24x768xf32, #tpu.memory_space<vmem>>, vector<8x256xf32>
      %473 = vector.broadcast %471 : f32 to vector<8x256xf32>
      %474 = arith.mulf %473, %472 : vector<8x256xf32>
      %475 = arith.addf %470, %474 : vector<8x256xf32>
      %c67 = arith.constant 67 : index
      %476 = memref.load %arg4[%c67] : memref<72xf32, #tpu.memory_space<smem>>
      %c8_201 = arith.constant 8 : index
      %c256_202 = arith.constant 256 : index
      %477 = vector.load %arg10[%c8_201, %c256_202] : memref<24x768xf32, #tpu.memory_space<vmem>>, vector<8x256xf32>
      %478 = vector.broadcast %476 : f32 to vector<8x256xf32>
      %479 = arith.mulf %478, %477 : vector<8x256xf32>
      %480 = arith.addf %475, %479 : vector<8x256xf32>
      %c68 = arith.constant 68 : index
      %481 = memref.load %arg4[%c68] : memref<72xf32, #tpu.memory_space<smem>>
      %c8_203 = arith.constant 8 : index
      %c512_204 = arith.constant 512 : index
      %482 = vector.load %arg10[%c8_203, %c512_204] : memref<24x768xf32, #tpu.memory_space<vmem>>, vector<8x256xf32>
      %483 = vector.broadcast %481 : f32 to vector<8x256xf32>
      %484 = arith.mulf %483, %482 : vector<8x256xf32>
      %485 = arith.addf %480, %484 : vector<8x256xf32>
      %c69 = arith.constant 69 : index
      %486 = memref.load %arg4[%c69] : memref<72xf32, #tpu.memory_space<smem>>
      %c16_205 = arith.constant 16 : index
      %c0_206 = arith.constant 0 : index
      %487 = vector.load %arg10[%c16_205, %c0_206] : memref<24x768xf32, #tpu.memory_space<vmem>>, vector<8x256xf32>
      %488 = vector.broadcast %486 : f32 to vector<8x256xf32>
      %489 = arith.mulf %488, %487 : vector<8x256xf32>
      %490 = arith.addf %485, %489 : vector<8x256xf32>
      %c70 = arith.constant 70 : index
      %491 = memref.load %arg4[%c70] : memref<72xf32, #tpu.memory_space<smem>>
      %c16_207 = arith.constant 16 : index
      %c256_208 = arith.constant 256 : index
      %492 = vector.load %arg10[%c16_207, %c256_208] : memref<24x768xf32, #tpu.memory_space<vmem>>, vector<8x256xf32>
      %493 = vector.broadcast %491 : f32 to vector<8x256xf32>
      %494 = arith.mulf %493, %492 : vector<8x256xf32>
      %495 = arith.addf %490, %494 : vector<8x256xf32>
      %c71 = arith.constant 71 : index
      %496 = memref.load %arg4[%c71] : memref<72xf32, #tpu.memory_space<smem>>
      %c16_209 = arith.constant 16 : index
      %c512_210 = arith.constant 512 : index
      %497 = vector.load %arg10[%c16_209, %c512_210] : memref<24x768xf32, #tpu.memory_space<vmem>>, vector<8x256xf32>
      %498 = vector.broadcast %496 : f32 to vector<8x256xf32>
      %499 = arith.mulf %498, %497 : vector<8x256xf32>
      %500 = arith.addf %495, %499 : vector<8x256xf32>
      %c7_211 = arith.constant 7 : index
      %501 = memref.load %arg5[%c7_211] : memref<8xf32, #tpu.memory_space<smem>>
      %502 = vector.broadcast %501 : f32 to vector<8x256xf32>
      %503 = arith.addf %500, %502 : vector<8x256xf32>
      %c7_212 = arith.constant 7 : index
      %c0_213 = arith.constant 0 : index
      %c0_214 = arith.constant 0 : index
      %504 = vector.load %arg8[%c7_212, %c0_213, %c0_214] : memref<8x8x256xf32, #tpu.memory_space<vmem>>, vector<1x8x256xf32>
      %505 = vector.shape_cast %504 : vector<1x8x256xf32> to vector<8x256xf32>
      %506 = vector.shape_cast %503 : vector<8x256xf32> to vector<1x8x256xf32>
      tpu.vector_store %arg8[%c7_212, %c0_213, %c0_214], %506 {strides = array<i32>} : memref<8x8x256xf32, #tpu.memory_space<vmem>>, vector<1x8x256xf32>,
    } else {
    }
    return
  }
  func.func @transform_0(%arg0: i32, %arg1: i32) -> i32 {
    %c0_i32 = arith.constant 0 : i32
    %c0_i32_0 = arith.constant 0 : i32
    return %c0_i32 : i32
  }
  func.func @transform_1(%arg0: i32, %arg1: i32) -> i32 {
    %c0_i32 = arith.constant 0 : i32
    %c0_i32_0 = arith.constant 0 : i32
    return %c0_i32 : i32
  }
  func.func @transform_2(%arg0: i32, %arg1: i32) -> i32 {
    %c0_i32 = arith.constant 0 : i32
    %c0_i32_0 = arith.constant 0 : i32
    return %c0_i32 : i32
  }
  func.func @transform_3(%arg0: i32, %arg1: i32) -> i32 {
    %c0_i32 = arith.constant 0 : i32
    %c0_i32_0 = arith.constant 0 : i32
    return %c0_i32 : i32
  }
  func.func @transform_4(%arg0: i32, %arg1: i32) -> (i32, i32, i32) {
    %c0_i32 = arith.constant 0 : i32
    %c0_i32_0 = arith.constant 0 : i32
    %c0_i32_1 = arith.constant 0 : i32
    return %c0_i32, %arg0, %c0_i32_0 : i32, i32, i32
  }
  func.func @transform_5(%arg0: i32, %arg1: i32) -> (i32, i32) {
    %c0_i32 = arith.constant 0 : i32
    %c0_i32_0 = arith.constant 0 : i32
    return %arg1, %c0_i32 : i32, i32
  }
  func.func @transform_6(%arg0: i32, %arg1: i32) -> (i32, i32, i32) {
    %c0_i32 = arith.constant 0 : i32
    %c0_i32_0 = arith.constant 0 : i32
    %c0_i32_1 = arith.constant 0 : i32
    return %c0_i32, %arg0, %c0_i32_0 : i32, i32, i32
  }
}

</mosaic_0001>

<llo_original>
// kernel: tpu_custom_call.1
$region0: #{tpu_custom_call.1}
  #allocation0 [shape = 'u32[]', space=smem, size = 0x4, offset = 0x4, fixed_abs, tag = 'smem constant byte address 0x4 - core index']
  #allocation1 [shape = 'u32[72,128]{1,0:T(1,128)}', space=vmem, size = 0x9000, scoped, tag = 'internal scratch']
  #allocation2 [shape = 'f32[24,128]{1,0:T(8,128)}', space=vmem, size = 0x3000, scoped, tag = 'scratch operand']
  #allocation3 [shape = 'f32[24,768]{1,0:T(8,128)}', space=vmem, size = 0x12000, scoped, tag = 'scratch operand']
  %s0 = inlined_call_operand.hbm [shape: f32[18], index: 0, kind: input, shape index: {}]
  %s1 = inlined_call_operand.hbm [shape: f32[3], index: 1, kind: input, shape index: {}]
  %s2 = inlined_call_operand.hbm [shape: f32[72], index: 2, kind: input, shape index: {}]
  %s3 = inlined_call_operand.hbm [shape: f32[8], index: 3, kind: input, shape index: {}]
  %s4 = inlined_call_operand.hbm [shape: f32[2,8,512], index: 4, kind: input, shape index: {}]
  %s5 = inlined_call_operand.hbm [shape: f32[384,768], index: 5, kind: input, shape index: {}]
  %s6 = inlined_call_operand.hbm [shape: f32[8,8,256], index: 6, kind: output, shape index: {}]
  %s7 = sld [smem:[#allocation0]]
  $region89: #{tpu_custom_call.1} parent=0
    _
  %s9 = ssub.s32 1, %s7
  %s10 = scalar_select 0, %s9, %s7
  $region1: #{tpu_custom_call.1} parent=0
    #allocation4 [shape = 'u8[512]{0}', space=smem, size = 0x200, scoped, tag = 'input window, operand 0, single buffered']
    #allocation5 [shape = 's32[2]{0}', space=sflag, size = 0x8, scoped, tag = 'scoped memory for tpu_custom_call.1']
    #allocation6 [shape = 's32[2]{0}', space=sflag, size = 0x8, scoped, tag = 'scoped memory for tpu_custom_call.1']
    #allocation7 [shape = 's32[2]{0}', space=sflag, size = 0x8, scoped, tag = 'scoped memory for tpu_custom_call.1']
    #allocation8 [shape = 'u8[512]{0}', space=smem, size = 0x200, scoped, tag = 'input window, operand 1, single buffered']
    #allocation9 [shape = 's32[1]{0}', space=sflag, size = 0x4, scoped, tag = 'scoped memory for tpu_custom_call.1']
    #allocation10 [shape = 'u8[512]{0}', space=smem, size = 0x200, scoped, tag = 'input window, operand 2, single buffered']
    #allocation11 [shape = 'u8[512]{0}', space=smem, size = 0x200, scoped, tag = 'input window, operand 3, single buffered']
    #allocation12 [shape = 's32[1]{0}', space=sflag, size = 0x4, scoped, tag = 'scoped memory for tpu_custom_call.1']
    #allocation13 [shape = 'u8[32768]{0}', space=vmem, size = 0x8000, scoped, tag = 'input window, operand 4, single buffered']
    #allocation14 [shape = 'u8[786432]{0}', space=vmem, size = 0xc0000, scoped, tag = 'input window, operand 5']
    #allocation15 [shape = 's32[2]{0}', space=sflag, size = 0x8, scoped, tag = 'scoped memory for tpu_custom_call.1']
    #allocation16 [shape = 'u8[65536]{0}', space=vmem, size = 0x10000, scoped, tag = 'output window, operand 0, single buffered']
    %11 = vsyncpa [#allocation7], 0
    %12 = vsyncpa [#allocation9], 0
    %13 = vsyncpa [#allocation12], 0
    %14 = vsyncpa [#allocation5], 0
    %15 = vsyncpa [#allocation15], 0
    %s16 = scalar_lea.sflag [#allocation15], 1
    %17 = vsyncpa %s16, 0
    %18 = vsyncpa [#allocation6], 0
    loop: start=0, step=1, limit=5
    $region2: #{tpu_custom_call.1} parent=1 // loop_pre_header
      _
    $region3: #{tpu_custom_call.1} parent=1 // loop_header
      %s20 = sphi 0, %s24
      %p21 = scmp.ge.s32.totalorder %s20, 5
      %s27 = sphi 0, %s39
      %s28 = sphi 0, %s35
      %s29 = sphi 0, %s27
      %s30 = sphi 0, %s28
      %s31 = sphi 0, %s29
      %s32 = sphi 0, %s30
      %s40 = sphi 0, %s40
      %s42 = sphi 0, %s40
      %s43 = sphi 0, %s42
      %s57 = sphi 0, %s43
      %s61 = sphi 0, %s61
      %s63 = sphi 0, %s61
      %s64 = sphi 0, %s63
      %s78 = sphi 0, %s64
      %s82 = sphi 0, %s82
      %s84 = sphi 0, %s82
      %s85 = sphi 0, %s84
      %s99 = sphi 0, %s85
      %s103 = sphi 0, %s103
      %s105 = sphi 0, %s103
      %s106 = sphi 0, %s105
      %s120 = sphi 0, %s106
      %s126 = sphi 0, %s128
      %s129 = sphi 0, %s126
      %s130 = sphi 0, %s129
      %s146 = sphi 0, %s130
      %s152 = sphi 0, %s154
      %s155 = sphi 0, %s152
      %s156 = sphi 0, %s155
      %s172 = sphi 0, %s156
      %s178 = sphi 0, %s180
      %s181 = sphi 0, %s178
      %s182 = sphi 0, %s181
      %s198 = sphi 0, %s182
    $region4: #{tpu_custom_call.1} parent=1 // loop_header_branch
      %23 = sbr.rel (%p21) target = $region8
    $region5: #{tpu_custom_call.1} parent=1 // loop_body
      %s25 = ssub.s32 %s20, 1
      %s26 = ssub.s32 %s20, 2
      %s33 = sadd.s32 1, %s28
      %p34 = scmp.ge.s32.totalorder %s33, 3
      %s35 = scalar_select %p34, 0, %s33
      %s36 = sadd.s32 1, %s27
      %s37 = scalar_select %p34, %s36, %s27
      %p38 = scmp.ge.s32.totalorder %s37, 1
      %s39 = scalar_select %p38, 0, %s37
      %s41 = sadd.s32 %s40, 1
      %p44 = scmp.eq.s32.totalorder %s20, 2
      %p45 = scmp.ne.s32.totalorder %s40, %s42
      %p46 = scmp.eq.s32.totalorder %s20, 0
      %p47 = por %p45, %p46
      %p48 = scmp.ne.s32.totalorder %s40, %s42
      %p49 = scmp.eq.s32.totalorder %s25, 2
      %p50 = por %p48, %p49
      %p51 = scmp.ne.s32.totalorder %s42, %s43
      %p52 = scmp.eq.s32.totalorder %s25, 0
      %p53 = por %p51, %p52
      %p54 = scmp.ne.s32.totalorder %s42, %s43
      %p55 = scmp.eq.s32.totalorder %s26, 2
      %p56 = por %p54, %p55
      %p58 = scmp.ne.s32.totalorder %s43, %s57
      %p59 = scmp.eq.s32.totalorder %s26, 0
      %p60 = por %p58, %p59
      %s62 = sadd.s32 %s61, 1
      %p65 = scmp.eq.s32.totalorder %s20, 2
      %p66 = scmp.ne.s32.totalorder %s61, %s63
      %p67 = scmp.eq.s32.totalorder %s20, 0
      %p68 = por %p66, %p67
      %p69 = scmp.ne.s32.totalorder %s61, %s63
      %p70 = scmp.eq.s32.totalorder %s25, 2
      %p71 = por %p69, %p70
      %p72 = scmp.ne.s32.totalorder %s63, %s64
      %p73 = scmp.eq.s32.totalorder %s25, 0
      %p74 = por %p72, %p73
      %p75 = scmp.ne.s32.totalorder %s63, %s64
      %p76 = scmp.eq.s32.totalorder %s26, 2
      %p77 = por %p75, %p76
      %p79 = scmp.ne.s32.totalorder %s64, %s78
      %p80 = scmp.eq.s32.totalorder %s26, 0
      %p81 = por %p79, %p80
      %s83 = sadd.s32 %s82, 1
      %p86 = scmp.eq.s32.totalorder %s20, 2
      %p87 = scmp.ne.s32.totalorder %s82, %s84
      %p88 = scmp.eq.s32.totalorder %s20, 0
      %p89 = por %p87, %p88
      %p90 = scmp.ne.s32.totalorder %s82, %s84
      %p91 = scmp.eq.s32.totalorder %s25, 2
      %p92 = por %p90, %p91
      %p93 = scmp.ne.s32.totalorder %s84, %s85
      %p94 = scmp.eq.s32.totalorder %s25, 0
      %p95 = por %p93, %p94
      %p96 = scmp.ne.s32.totalorder %s84, %s85
      %p97 = scmp.eq.s32.totalorder %s26, 2
      %p98 = por %p96, %p97
      %p100 = scmp.ne.s32.totalorder %s85, %s99
      %p101 = scmp.eq.s32.totalorder %s26, 0
      %p102 = por %p100, %p101
      %s104 = sadd.s32 %s103, 1
      %p107 = scmp.eq.s32.totalorder %s20, 2
      %p108 = scmp.ne.s32.totalorder %s103, %s105
      %p109 = scmp.eq.s32.totalorder %s20, 0
      %p110 = por %p108, %p109
      %p111 = scmp.ne.s32.totalorder %s103, %s105
      %p112 = scmp.eq.s32.totalorder %s25, 2
      %p113 = por %p111, %p112
      %p114 = scmp.ne.s32.totalorder %s105, %s106
      %p115 = scmp.eq.s32.totalorder %s25, 0
      %p116 = por %p114, %p115
      %p117 = scmp.ne.s32.totalorder %s105, %s106
      %p118 = scmp.eq.s32.totalorder %s26, 2
      %p119 = por %p117, %p118
      %p121 = scmp.ne.s32.totalorder %s106, %s120
      %p122 = scmp.eq.s32.totalorder %s26, 0
      %p123 = por %p121, %p122
      %s124 = ssub.s32 %s27, %s39
      %p125 = scmp.eq.s32.totalorder %s124, 0
      %s127 = sadd.s32 %s126, 1
      %s128 = scalar_select %p125, %s126, %s127
      %p131 = pneg %p125
      %p132 = scmp.eq.s32.totalorder %s20, 2
      %p133 = por %p131, %p132
      %p134 = scmp.ne.s32.totalorder %s126, %s129
      %p135 = scmp.eq.s32.totalorder %s20, 0
      %p136 = por %p134, %p135
      %p137 = scmp.ne.s32.totalorder %s126, %s129
      %p138 = scmp.eq.s32.totalorder %s25, 2
      %p139 = por %p137, %p138
      %p140 = scmp.ne.s32.totalorder %s129, %s130
      %p141 = scmp.eq.s32.totalorder %s25, 0
      %p142 = por %p140, %p141
      %p143 = scmp.ne.s32.totalorder %s129, %s130
      %p144 = scmp.eq.s32.totalorder %s26, 2
      %p145 = por %p143, %p144
      %p147 = scmp.ne.s32.totalorder %s130, %s146
      %p148 = scmp.eq.s32.totalorder %s26, 0
      %p149 = por %p147, %p148
      %s150 = ssub.s32 %s28, %s35
      %p151 = scmp.eq.s32.totalorder %s150, 0
      %s153 = sadd.s32 %s152, 1
      %s154 = scalar_select %p151, %s152, %s153
      %p157 = pneg %p151
      %p158 = scmp.eq.s32.totalorder %s20, 2
      %p159 = por %p157, %p158
      %p160 = scmp.ne.s32.totalorder %s152, %s155
      %p161 = scmp.eq.s32.totalorder %s20, 0
      %p162 = por %p160, %p161
      %p163 = scmp.ne.s32.totalorder %s152, %s155
      %p164 = scmp.eq.s32.totalorder %s25, 2
      %p165 = por %p163, %p164
      %p166 = scmp.ne.s32.totalorder %s155, %s156
      %p167 = scmp.eq.s32.totalorder %s25, 0
      %p168 = por %p166, %p167
      %p169 = scmp.ne.s32.totalorder %s155, %s156
      %p170 = scmp.eq.s32.totalorder %s26, 2
      %p171 = por %p169, %p170
      %p173 = scmp.ne.s32.totalorder %s156, %s172
      %p174 = scmp.eq.s32.totalorder %s26, 0
      %p175 = por %p173, %p174
      %s176 = ssub.s32 %s27, %s39
      %p177 = scmp.eq.s32.totalorder %s176, 0
      %s179 = sadd.s32 %s178, 1
      %s180 = scalar_select %p177, %s178, %s179
      %p183 = pneg %p177
      %p184 = scmp.eq.s32.totalorder %s20, 2
      %p185 = por %p183, %p184
      %p186 = scmp.ne.s32.totalorder %s178, %s181
      %p187 = scmp.eq.s32.totalorder %s20, 0
      %p188 = por %p186, %p187
      %p189 = scmp.ne.s32.totalorder %s178, %s181
      %p190 = scmp.eq.s32.totalorder %s25, 2
      %p191 = por %p189, %p190
      %p192 = scmp.ne.s32.totalorder %s181, %s182
      %p193 = scmp.eq.s32.totalorder %s25, 0
      %p194 = por %p192, %p193
      %p195 = scmp.ne.s32.totalorder %s181, %s182
      %p196 = scmp.eq.s32.totalorder %s26, 2
      %p197 = por %p195, %p196
      %p199 = scmp.ne.s32.totalorder %s182, %s198
      %p200 = scmp.eq.s32.totalorder %s26, 0
      %p201 = por %p199, %p200
      %p202 = scmp.le.s32.totalorder 1, %s20
      %p203 = scmp.lt.s32.totalorder %s20, 4
      %p204 = pnand %p202, %p203
      %p205 = pneg %p204
      // Predicated region
      $region9: #{tpu_custom_call.1} parent=5 // pred_check
        _
      $region10: #{tpu_custom_call.1} parent=5 // pred_check_branch
        %207 = sbr.rel (%p204) target = $region12
      $region11: #{tpu_custom_call.1} parent=5 // pred_region
        %s208 = ssub.s32 %s20, 1
        // Predicated region
        $region13: #{tpu_custom_call.1} parent=11 // pred_check
          %p209 = pneg %p53
        $region14: #{tpu_custom_call.1} parent=11 // pred_check_branch
          %211 = sbr.rel (%p209) target = $region16
        $region15: #{tpu_custom_call.1} parent=11 // pred_region
          %213 = vsyncadd [#allocation7], 0
          %s215 = sshll.u32 %s0, 4
          %s216 = int_to_ptr.hbm [resolvable:$true] %s215
          %218 = dma.hbm_to_smem %s216, 16, [#allocation4], [#allocation7]
        $region16: #{tpu_custom_call.1} parent=11 // pred_fallthru
          _
        // Predicated region
        $region17: #{tpu_custom_call.1} parent=11 // pred_check
          %p219 = pneg %p74
        $region18: #{tpu_custom_call.1} parent=11 // pred_check_branch
          %221 = sbr.rel (%p219) target = $region20
        $region19: #{tpu_custom_call.1} parent=11 // pred_region
          %223 = vsyncadd [#allocation9], 0
          %s225 = sshll.u32 %s1, 4
          %s226 = int_to_ptr.hbm [resolvable:$true] %s225
          %228 = dma.hbm_to_smem %s226, 16, [#allocation8], [#allocation9]
        $region20: #{tpu_custom_call.1} parent=11 // pred_fallthru
          _
        // Predicated region
        $region21: #{tpu_custom_call.1} parent=11 // pred_check
          %p229 = pneg %p95
        $region22: #{tpu_custom_call.1} parent=11 // pred_check_branch
          %231 = sbr.rel (%p229) target = $region24
        $region23: #{tpu_custom_call.1} parent=11 // pred_region
          %233 = vsyncadd [#allocation9], 0
          %s235 = sshll.u32 %s2, 4
          %s236 = int_to_ptr.hbm [resolvable:$true] %s235
          %238 = dma.hbm_to_smem %s236, 16, [#allocation10], [#allocation9]
        $region24: #{tpu_custom_call.1} parent=11 // pred_fallthru
          _
        // Predicated region
        $region25: #{tpu_custom_call.1} parent=11 // pred_check
          %p239 = pneg %p116
        $region26: #{tpu_custom_call.1} parent=11 // pred_check_branch
          %241 = sbr.rel (%p239) target = $region28
        $region27: #{tpu_custom_call.1} parent=11 // pred_region
          %243 = vsyncadd [#allocation12], 0
          %s245 = sshll.u32 %s3, 4
          %s246 = int_to_ptr.hbm [resolvable:$true] %s245
          %248 = dma.hbm_to_smem %s246, 16, [#allocation11], [#allocation12]
        $region28: #{tpu_custom_call.1} parent=11 // pred_fallthru
          _
        // Predicated region
        $region29: #{tpu_custom_call.1} parent=11 // pred_check
          %p249 = pneg %p142
        $region30: #{tpu_custom_call.1} parent=11 // pred_check_branch
          %251 = sbr.rel (%p249) target = $region32
        $region31: #{tpu_custom_call.1} parent=11 // pred_region
          %253 = vsyncadd [#allocation5], 0
          %s254 = smul.addr %s29, 4
          %s255 = smul.addr %s254, 8
          %s256 = scalar_lea.hbm %s4, %s255
          %s257 = sshll.u32 %s256, 4
          %s258 = int_to_ptr.hbm [resolvable:$true] %s257
          %s259 = sshll.u32 [#allocation13], 4
          %s260 = int_to_ptr.vmem [resolvable:$true] %s259
          %265 = dma.hbm_to_vmem [thread:$0]  %s258, 1024, %s260, [#allocation5], 512, 512, 32
        $region32: #{tpu_custom_call.1} parent=11 // pred_fallthru
          _
      $region12: #{tpu_custom_call.1} parent=5 // pred_fallthru
        _
      %p266 = scmp.lt.s32.totalorder %s20, 3
      // Predicated region
      $region33: #{tpu_custom_call.1} parent=5 // pred_check
        %p267 = pneg %p266
      $region34: #{tpu_custom_call.1} parent=5 // pred_check_branch
        %269 = sbr.rel (%p267) target = $region36
      $region35: #{tpu_custom_call.1} parent=5 // pred_region
        // Predicated region
        $region37: #{tpu_custom_call.1} parent=35 // pred_check
          %p270 = pneg %p162
        $region38: #{tpu_custom_call.1} parent=35 // pred_check_branch
          %272 = sbr.rel (%p270) target = $region40
        $region39: #{tpu_custom_call.1} parent=35 // pred_region
          %s273 = sand.u32 %s152, 1
          %s274 = scalar_lea.sflag [#allocation15], %s273
          %s275 = sand.u32 %s152, 1
          %s276 = smul.addr %s275, 768
          %s277 = scalar_lea.vmem [#allocation14], %s276
          %s278 = smul.u32 16, %s28
          %280 = vsyncadd %s274, 0
          %s281 = smul.addr %s278, 6
          %s282 = smul.addr %s281, 8
          %s283 = scalar_lea.hbm %s5, %s282
          %s284 = sshll.u32 %s283, 4
          %s285 = int_to_ptr.hbm [resolvable:$true] %s284
          %s286 = sshll.u32 %s277, 4
          %s287 = int_to_ptr.vmem [resolvable:$true] %s286
          %292 = dma.hbm_to_vmem [thread:$0]  %s285, 12288, %s287, %s274, 768, 768, 48
        $region40: #{tpu_custom_call.1} parent=35 // pred_fallthru
          _
      $region36: #{tpu_custom_call.1} parent=5 // pred_fallthru
        _
      %p293 = scmp.le.s32.totalorder 1, %s20
      %p294 = scmp.lt.s32.totalorder %s20, 4
      %p295 = pnand %p293, %p294
      %p296 = pneg %p295
      // Predicated region
      $region41: #{tpu_custom_call.1} parent=5 // pred_check
        _
      $region42: #{tpu_custom_call.1} parent=5 // pred_check_branch
        %298 = sbr.rel (%p295) target = $region44
      $region43: #{tpu_custom_call.1} parent=5 // pred_region
        %s299 = ssub.s32 %s20, 1
        // Predicated region
        $region45: #{tpu_custom_call.1} parent=43 // pred_check
          %p300 = pneg %p53
        $region46: #{tpu_custom_call.1} parent=43 // pred_check_branch
          %302 = sbr.rel (%p300) target = $region48
        $region47: #{tpu_custom_call.1} parent=43 // pred_region
          %304 = dma.done [#allocation7], 16
        $region48: #{tpu_custom_call.1} parent=43 // pred_fallthru
          _
        // Predicated region
        $region49: #{tpu_custom_call.1} parent=43 // pred_check
          %p305 = pneg %p74
        $region50: #{tpu_custom_call.1} parent=43 // pred_check_branch
          %307 = sbr.rel (%p305) target = $region52
        $region51: #{tpu_custom_call.1} parent=43 // pred_region
          %309 = dma.done [#allocation9], 16
        $region52: #{tpu_custom_call.1} parent=43 // pred_fallthru
          _
        // Predicated region
        $region53: #{tpu_custom_call.1} parent=43 // pred_check
          %p310 = pneg %p95
        $region54: #{tpu_custom_call.1} parent=43 // pred_check_branch
          %312 = sbr.rel (%p310) target = $region56
        $region55: #{tpu_custom_call.1} parent=43 // pred_region
          %314 = dma.done [#allocation9], 16
        $region56: #{tpu_custom_call.1} parent=43 // pred_fallthru
          _
        // Predicated region
        $region57: #{tpu_custom_call.1} parent=43 // pred_check
          %p315 = pneg %p116
        $region58: #{tpu_custom_call.1} parent=43 // pred_check_branch
          %317 = sbr.rel (%p315) target = $region60
        $region59: #{tpu_custom_call.1} parent=43 // pred_region
          %319 = dma.done [#allocation12], 16
        $region60: #{tpu_custom_call.1} parent=43 // pred_fallthru
          _
        // Predicated region
        $region61: #{tpu_custom_call.1} parent=43 // pred_check
          %p320 = pneg %p142
        $region62: #{tpu_custom_call.1} parent=43 // pred_check_branch
          %322 = sbr.rel (%p320) target = $region64
        $region63: #{tpu_custom_call.1} parent=43 // pred_region
          %324 = dma.done [#allocation5], 1024
        $region64: #{tpu_custom_call.1} parent=43 // pred_fallthru
          _
        %s325 = sand.u32 %s155, 1
        %s326 = scalar_lea.sflag [#allocation15], %s325
        %s327 = sand.u32 %s155, 1
        %s328 = smul.addr %s327, 768
        %s329 = scalar_lea.vmem [#allocation14], %s328
        // Predicated region
        $region65: #{tpu_custom_call.1} parent=43 // pred_check
          %p330 = pneg %p168
        $region66: #{tpu_custom_call.1} parent=43 // pred_check_branch
          %332 = sbr.rel (%p330) target = $region68
        $region67: #{tpu_custom_call.1} parent=43 // pred_region
          %334 = dma.done %s326, 12288
        $region68: #{tpu_custom_call.1} parent=43 // pred_fallthru
          _
        %335 = sfence
        %p336 = pneg %p53
        %p337 = pneg %p50
        %p338 = pneg %p74
        %p339 = pneg %p71
        %p340 = pneg %p95
        %p341 = pneg %p92
        %p342 = pneg %p116
        %p343 = pneg %p113
        %p344 = pneg %p142
        %p345 = pneg %p139
        %s346 = sand.u32 %s155, 1
        %s347 = scalar_lea.sflag [#allocation15], %s346
        %s348 = sand.u32 %s155, 1
        %s349 = smul.addr %s348, 768
        %s350 = scalar_lea.vmem [#allocation14], %s349
        %p351 = pneg %p168
        %p352 = pneg %p165
        %p353 = pneg %p194
        %p354 = pneg %p191
        %s355 = smul.u32 16, %s30
        %p356 = scmp.eq.s32.totalorder %s30, 0
        // Predicated region
        $region69: #{tpu_custom_call.1} parent=43 // pred_check
          %p357 = pneg %p356
        $region70: #{tpu_custom_call.1} parent=43 // pred_check_branch
          %359 = sbr.rel (%p357) target = $region72
        $region71: #{tpu_custom_call.1} parent=43 // pred_region
          %360 = vst [vmem:[#allocation3] sm:$0xff] 0.0
          %361 = vst [vmem:[#allocation3 + $0x8] sm:$0xff] 0.0
          %362 = vst [vmem:[#allocation3 + $0x10] sm:$0xff] 0.0
          %363 = vst [vmem:[#allocation3 + $0x18] sm:$0xff] 0.0
          %364 = vst [vmem:[#allocation3 + $0x20] sm:$0xff] 0.0
          %365 = vst [vmem:[#allocation3 + $0x28] sm:$0xff] 0.0
          %366 = vst [vmem:[#allocation3 + $0x30] sm:$0xff] 0.0
          %367 = vst [vmem:[#allocation3 + $0x38] sm:$0xff] 0.0
          %368 = vst [vmem:[#allocation3 + $0x40] sm:$0xff] 0.0
          %369 = vst [vmem:[#allocation3 + $0x48] sm:$0xff] 0.0
          %370 = vst [vmem:[#allocation3 + $0x50] sm:$0xff] 0.0
          %371 = vst [vmem:[#allocation3 + $0x58] sm:$0xff] 0.0
          %372 = vst [vmem:[#allocation3 + $0x60] sm:$0xff] 0.0
          %373 = vst [vmem:[#allocation3 + $0x68] sm:$0xff] 0.0
          %374 = vst [vmem:[#allocation3 + $0x70] sm:$0xff] 0.0
          %375 = vst [vmem:[#allocation3 + $0x78] sm:$0xff] 0.0
          %376 = vst [vmem:[#allocation3 + $0x80] sm:$0xff] 0.0
          %377 = vst [vmem:[#allocation3 + $0x88] sm:$0xff] 0.0
        $region72: #{tpu_custom_call.1} parent=43 // pred_fallthru
          _
        %s378 = smul.u32 %s30, 128
        %s379 = sshra.s32 %s378, 7
        %s380 = sand.u32 %s378, 127
        %s381 = smul.addr %s379, 8
        %s382 = scalar_lea.vmem [#allocation13], %s381
        %v383 = vld [vmem:[%s382] sm:$0xff]
        %v384 = vld [vmem:[%s382 + $0x8] sm:$0xff]
        %s385 = sadd.s32 %s379, 4
        %s386 = smul.addr %s385, 8
        %s387 = scalar_lea.vmem [#allocation13], %s386
        %v388 = vld [vmem:[%s387] sm:$0xff]
        %v389 = vld [vmem:[%s387 + $0x8] sm:$0xff]
        %s390 = sld [smem:[#allocation8]]
        %s391 = sld [smem:[#allocation4]]
        %v392 = vstv %s391
        %v393 = vmul.f32 %v383, %v392
        %v394 = vstv %s390
        %v395 = vadd.f32 %v394, %v393
        %s396 = sld [smem:[#allocation4 + $0x1]]
        %v397 = vstv %s396
        %v398 = vmul.f32 %v383, %v397
        %v399 = vmul.f32 %v384, %v397
        %402 = vrot.lane.b32.xlu0 %v398, 127
        %v403 = vpop.permute.xlu0 %402
        %404 = vrot.lane.b32.xlu0 %v399, 127
        %v405 = vpop.permute.xlu0 %404
        %vm406 = vcmask 1039360
        %v407 = vsel %vm406, %v403, %v405
        %v409 = vadd.f32 %v395, %v407
        %s410 = sld [smem:[#allocation4 + $0x2]]
        %v411 = vstv %s410
        %v412 = vmul.f32 %v383, %v411
        %v413 = vmul.f32 %v384, %v411
        %416 = vrot.lane.b32.xlu0 %v412, 126
        %v417 = vpop.permute.xlu0 %416
        %418 = vrot.lane.b32.xlu0 %v413, 126
        %v419 = vpop.permute.xlu0 %418
        %vm420 = vcmask 1031168
        %v421 = vsel %vm420, %v417, %v419
        %v423 = vadd.f32 %v409, %v421
        %s424 = sld [smem:[#allocation4 + $0x3]]
        %v425 = vstv %s424
        %v426 = vmul.f32 %v388, %v425
        %v427 = vadd.f32 %v423, %v426
        %s428 = sld [smem:[#allocation4 + $0x4]]
        %v429 = vstv %s428
        %v430 = vmul.f32 %v388, %v429
        %v431 = vmul.f32 %v389, %v429
        %434 = vrot.lane.b32.xlu0 %v430, 127
        %v435 = vpop.permute.xlu0 %434
        %436 = vrot.lane.b32.xlu0 %v431, 127
        %v437 = vpop.permute.xlu0 %436
        %v438 = vsel %vm406, %v435, %v437
        %v440 = vadd.f32 %v427, %v438
        %s441 = sld [smem:[#allocation4 + $0x5]]
        %v442 = vstv %s441
        %v443 = vmul.f32 %v388, %v442
        %v444 = vmul.f32 %v389, %v442
        %447 = vrot.lane.b32.xlu0 %v443, 126
        %v448 = vpop.permute.xlu0 %447
        %449 = vrot.lane.b32.xlu0 %v444, 126
        %v450 = vpop.permute.xlu0 %449
        %v451 = vsel %vm420, %v448, %v450
        %v453 = vadd.f32 %v440, %v451
        %454 = vst [vmem:[#allocation2] sm:$0xff] %v453
        %s455 = sld [smem:[#allocation8 + $0x1]]
        %s456 = sld [smem:[#allocation4 + $0x6]]
        %v457 = vstv %s456
        %v458 = vmul.f32 %v383, %v457
        %v459 = vstv %s455
        %v460 = vadd.f32 %v459, %v458
        %s461 = sld [smem:[#allocation4 + $0x7]]
        %v462 = vstv %s461
        %v463 = vmul.f32 %v383, %v462
        %v464 = vmul.f32 %v384, %v462
        %467 = vrot.lane.b32.xlu0 %v463, 127
        %v468 = vpop.permute.xlu0 %467
        %469 = vrot.lane.b32.xlu0 %v464, 127
        %v470 = vpop.permute.xlu0 %469
        %v471 = vsel %vm406, %v468, %v470
        %v473 = vadd.f32 %v460, %v471
        %s474 = sld [smem:[#allocation4 + $0x8]]
        %v475 = vstv %s474
        %v476 = vmul.f32 %v383, %v475
        %v477 = vmul.f32 %v384, %v475
        %480 = vrot.lane.b32.xlu0 %v476, 126
        %v481 = vpop.permute.xlu0 %480
        %482 = vrot.lane.b32.xlu0 %v477, 126
        %v483 = vpop.permute.xlu0 %482
        %v484 = vsel %vm420, %v481, %v483
        %v486 = vadd.f32 %v473, %v484
        %s487 = sld [smem:[#allocation4 + $0x9]]
        %v488 = vstv %s487
        %v489 = vmul.f32 %v388, %v488
        %v490 = vadd.f32 %v486, %v489
        %s491 = sld [smem:[#allocation4 + $0xa]]
        %v492 = vstv %s491
        %v493 = vmul.f32 %v388, %v492
        %v494 = vmul.f32 %v389, %v492
        %497 = vrot.lane.b32.xlu0 %v493, 127
        %v498 = vpop.permute.xlu0 %497
        %499 = vrot.lane.b32.xlu0 %v494, 127
        %v500 = vpop.permute.xlu0 %499
        %v501 = vsel %vm406, %v498, %v500
        %v503 = vadd.f32 %v490, %v501
        %s504 = sld [smem:[#allocation4 + $0xb]]
        %v505 = vstv %s504
        %v506 = vmul.f32 %v388, %v505
        %v507 = vmul.f32 %v389, %v505
        %510 = vrot.lane.b32.xlu0 %v506, 126
        %v511 = vpop.permute.xlu0 %510
        %512 = vrot.lane.b32.xlu0 %v507, 126
        %v513 = vpop.permute.xlu0 %512
        %v514 = vsel %vm420, %v511, %v513
        %v516 = vadd.f32 %v503, %v514
        %517 = vst [vmem:[#allocation2 + $0x8] sm:$0xff] %v516
        %s518 = sld [smem:[#allocation8 + $0x2]]
        %s519 = sld [smem:[#allocation4 + $0xc]]
        %v520 = vstv %s519
        %v521 = vmul.f32 %v383, %v520
        %v522 = vstv %s518
        %v523 = vadd.f32 %v522, %v521
        %s524 = sld [smem:[#allocation4 + $0xd]]
        %v525 = vstv %s524
        %v526 = vmul.f32 %v383, %v525
        %v527 = vmul.f32 %v384, %v525
        %530 = vrot.lane.b32.xlu0 %v526, 127
        %v531 = vpop.permute.xlu0 %530
        %532 = vrot.lane.b32.xlu0 %v527, 127
        %v533 = vpop.permute.xlu0 %532
        %v534 = vsel %vm406, %v531, %v533
        %v536 = vadd.f32 %v523, %v534
        %s537 = sld [smem:[#allocation4 + $0xe]]
        %v538 = vstv %s537
        %v539 = vmul.f32 %v383, %v538
        %v540 = vmul.f32 %v384, %v538
        %543 = vrot.lane.b32.xlu0 %v539, 126
        %v544 = vpop.permute.xlu0 %543
        %545 = vrot.lane.b32.xlu0 %v540, 126
        %v546 = vpop.permute.xlu0 %545
        %v547 = vsel %vm420, %v544, %v546
        %v549 = vadd.f32 %v536, %v547
        %s550 = sld [smem:[#allocation4 + $0xf]]
        %v551 = vstv %s550
        %v552 = vmul.f32 %v388, %v551
        %v553 = vadd.f32 %v549, %v552
        %s554 = sld [smem:[#allocation4 + $0x10]]
        %v555 = vstv %s554
        %v556 = vmul.f32 %v388, %v555
        %v557 = vmul.f32 %v389, %v555
        %560 = vrot.lane.b32.xlu0 %v556, 127
        %v561 = vpop.permute.xlu0 %560
        %562 = vrot.lane.b32.xlu0 %v557, 127
        %v563 = vpop.permute.xlu0 %562
        %v564 = vsel %vm406, %v561, %v563
        %v566 = vadd.f32 %v553, %v564
        %s567 = sld [smem:[#allocation4 + $0x11]]
        %v568 = vstv %s567
        %v569 = vmul.f32 %v388, %v568
        %v570 = vmul.f32 %v389, %v568
        %573 = vrot.lane.b32.xlu0 %v569, 126
        %v574 = vpop.permute.xlu0 %573
        %575 = vrot.lane.b32.xlu0 %v570, 126
        %v576 = vpop.permute.xlu0 %575
        %v577 = vsel %vm420, %v574, %v576
        %v579 = vadd.f32 %v566, %v577
        %580 = vst [vmem:[#allocation2 + $0x10] sm:$0xff] %v579
        %v581 = vld [vmem:[#allocation3] sm:$0xff]
        %v582 = vld [vmem:[#allocation3 + $0x8] sm:$0xff]
        %v583 = vld [vmem:[#allocation3 + $0x10] sm:$0xff]
        %v584 = vld [vmem:[#allocation3 + $0x18] sm:$0xff]
        %v585 = vld [vmem:[#allocation3 + $0x20] sm:$0xff]
        %v586 = vld [vmem:[#allocation3 + $0x28] sm:$0xff]
        %v587 = vld [vmem:[#allocation3 + $0x30] sm:$0xff]
        %v588 = vld [vmem:[#allocation3 + $0x38] sm:$0xff]
        %v589 = vld [vmem:[#allocation3 + $0x40] sm:$0xff]
        %v590 = vld [vmem:[#allocation3 + $0x48] sm:$0xff]
        %v591 = vld [vmem:[#allocation3 + $0x50] sm:$0xff]
        %v592 = vld [vmem:[#allocation3 + $0x58] sm:$0xff]
        %v593 = vld [vmem:[#allocation3 + $0x60] sm:$0xff]
        %v594 = vld [vmem:[#allocation3 + $0x68] sm:$0xff]
        %v595 = vld [vmem:[#allocation3 + $0x70] sm:$0xff]
        %v596 = vld [vmem:[#allocation3 + $0x78] sm:$0xff]
        %v597 = vld [vmem:[#allocation3 + $0x80] sm:$0xff]
        %v598 = vld [vmem:[#allocation3 + $0x88] sm:$0xff]
        %v599 = vld [vmem:[#allocation2] sm:$0xff]
        %v600 = vld [vmem:[#allocation2 + $0x8] sm:$0xff]
        %v601 = vld [vmem:[#allocation2 + $0x10] sm:$0xff]
        %v602 = vld [vmem:[%s329] sm:$0xff]
        %v603 = vld [vmem:[%s329 + $0x8] sm:$0xff]
        %v604 = vld [vmem:[%s329 + $0x10] sm:$0xff]
        %v605 = vld [vmem:[%s329 + $0x18] sm:$0xff]
        %v606 = vld [vmem:[%s329 + $0x20] sm:$0xff]
        %v607 = vld [vmem:[%s329 + $0x28] sm:$0xff]
        %v608 = vld [vmem:[%s329 + $0x30] sm:$0xff]
        %v609 = vld [vmem:[%s329 + $0x38] sm:$0xff]
        %v610 = vld [vmem:[%s329 + $0x40] sm:$0xff]
        %v611 = vld [vmem:[%s329 + $0x48] sm:$0xff]
        %v612 = vld [vmem:[%s329 + $0x50] sm:$0xff]
        %v613 = vld [vmem:[%s329 + $0x58] sm:$0xff]
        %v614 = vld [vmem:[%s329 + $0x60] sm:$0xff]
        %v615 = vld [vmem:[%s329 + $0x68] sm:$0xff]
        %v616 = vld [vmem:[%s329 + $0x70] sm:$0xff]
        %v617 = vld [vmem:[%s329 + $0x78] sm:$0xff]
        %v618 = vld [vmem:[%s329 + $0x80] sm:$0xff]
        %v619 = vld [vmem:[%s329 + $0x88] sm:$0xff]
        %v620 = vld [vmem:[%s329 + $0x90] sm:$0xff]
        %v621 = vld [vmem:[%s329 + $0x98] sm:$0xff]
        %v622 = vld [vmem:[%s329 + $0xa0] sm:$0xff]
        %v623 = vld [vmem:[%s329 + $0xa8] sm:$0xff]
        %v624 = vld [vmem:[%s329 + $0xb0] sm:$0xff]
        %v625 = vld [vmem:[%s329 + $0xb8] sm:$0xff]
        %v626 = vld [vmem:[%s329 + $0xc0] sm:$0xff]
        %v627 = vld [vmem:[%s329 + $0xc8] sm:$0xff]
        %v628 = vld [vmem:[%s329 + $0xd0] sm:$0xff]
        %v629 = vld [vmem:[%s329 + $0xd8] sm:$0xff]
        %v630 = vld [vmem:[%s329 + $0xe0] sm:$0xff]
        %v631 = vld [vmem:[%s329 + $0xe8] sm:$0xff]
        %v632 = vld [vmem:[%s329 + $0xf0] sm:$0xff]
        %v633 = vld [vmem:[%s329 + $0xf8] sm:$0xff]
        %v634 = vld [vmem:[%s329 + $0x100] sm:$0xff]
        %v635 = vld [vmem:[%s329 + $0x108] sm:$0xff]
        %v636 = vld [vmem:[%s329 + $0x110] sm:$0xff]
        %v637 = vld [vmem:[%s329 + $0x118] sm:$0xff]
        %v638 = vld [vmem:[%s329 + $0x120] sm:$0xff]
        %v639 = vld [vmem:[%s329 + $0x128] sm:$0xff]
        %v640 = vld [vmem:[%s329 + $0x130] sm:$0xff]
        %v641 = vld [vmem:[%s329 + $0x138] sm:$0xff]
        %v642 = vld [vmem:[%s329 + $0x140] sm:$0xff]
        %v643 = vld [vmem:[%s329 + $0x148] sm:$0xff]
        %v644 = vld [vmem:[%s329 + $0x150] sm:$0xff]
        %v645 = vld [vmem:[%s329 + $0x158] sm:$0xff]
        %v646 = vld [vmem:[%s329 + $0x160] sm:$0xff]
        %v647 = vld [vmem:[%s329 + $0x168] sm:$0xff]
        %v648 = vld [vmem:[%s329 + $0x170] sm:$0xff]
        %v649 = vld [vmem:[%s329 + $0x178] sm:$0xff]
        %v650 = vld [vmem:[%s329 + $0x180] sm:$0xff]
        %v651 = vld [vmem:[%s329 + $0x188] sm:$0xff]
        %v652 = vld [vmem:[%s329 + $0x190] sm:$0xff]
        %v653 = vld [vmem:[%s329 + $0x198] sm:$0xff]
        %v654 = vld [vmem:[%s329 + $0x1a0] sm:$0xff]
        %v655 = vld [vmem:[%s329 + $0x1a8] sm:$0xff]
        %v656 = vld [vmem:[%s329 + $0x1b0] sm:$0xff]
        %v657 = vld [vmem:[%s329 + $0x1b8] sm:$0xff]
        %v658 = vld [vmem:[%s329 + $0x1c0] sm:$0xff]
        %v659 = vld [vmem:[%s329 + $0x1c8] sm:$0xff]
        %v660 = vld [vmem:[%s329 + $0x1d0] sm:$0xff]
        %v661 = vld [vmem:[%s329 + $0x1d8] sm:$0xff]
        %v662 = vld [vmem:[%s329 + $0x1e0] sm:$0xff]
        %v663 = vld [vmem:[%s329 + $0x1e8] sm:$0xff]
        %v664 = vld [vmem:[%s329 + $0x1f0] sm:$0xff]
        %v665 = vld [vmem:[%s329 + $0x1f8] sm:$0xff]
        %v666 = vld [vmem:[%s329 + $0x200] sm:$0xff]
        %v667 = vld [vmem:[%s329 + $0x208] sm:$0xff]
        %v668 = vld [vmem:[%s329 + $0x210] sm:$0xff]
        %v669 = vld [vmem:[%s329 + $0x218] sm:$0xff]
        %v670 = vld [vmem:[%s329 + $0x220] sm:$0xff]
        %v671 = vld [vmem:[%s329 + $0x228] sm:$0xff]
        %v672 = vld [vmem:[%s329 + $0x230] sm:$0xff]
        %v673 = vld [vmem:[%s329 + $0x238] sm:$0xff]
        %v674 = vld [vmem:[%s329 + $0x240] sm:$0xff]
        %v675 = vld [vmem:[%s329 + $0x248] sm:$0xff]
        %v676 = vld [vmem:[%s329 + $0x250] sm:$0xff]
        %v677 = vld [vmem:[%s329 + $0x258] sm:$0xff]
        %v678 = vld [vmem:[%s329 + $0x260] sm:$0xff]
        %v679 = vld [vmem:[%s329 + $0x268] sm:$0xff]
        %v680 = vld [vmem:[%s329 + $0x270] sm:$0xff]
        %v681 = vld [vmem:[%s329 + $0x278] sm:$0xff]
        %v682 = vld [vmem:[%s329 + $0x280] sm:$0xff]
        %v683 = vld [vmem:[%s329 + $0x288] sm:$0xff]
        %v684 = vld [vmem:[%s329 + $0x290] sm:$0xff]
        %v685 = vld [vmem:[%s329 + $0x298] sm:$0xff]
        %v686 = vld [vmem:[%s329 + $0x2a0] sm:$0xff]
        %v687 = vld [vmem:[%s329 + $0x2a8] sm:$0xff]
        %v688 = vld [vmem:[%s329 + $0x2b0] sm:$0xff]
        %v689 = vld [vmem:[%s329 + $0x2b8] sm:$0xff]
        %v690 = vld [vmem:[%s329 + $0x2c0] sm:$0xff]
        %v691 = vld [vmem:[%s329 + $0x2c8] sm:$0xff]
        %v692 = vld [vmem:[%s329 + $0x2d0] sm:$0xff]
        %v693 = vld [vmem:[%s329 + $0x2d8] sm:$0xff]
        %v694 = vld [vmem:[%s329 + $0x2e0] sm:$0xff]
        %v695 = vld [vmem:[%s329 + $0x2e8] sm:$0xff]
        %v696 = vld [vmem:[%s329 + $0x2f0] sm:$0xff]
        %v697 = vld [vmem:[%s329 + $0x2f8] sm:$0xff]
        %698 = vmatpush.msra.mxu0 %v692
        %699 = vmatpush.msra.mxu0 %v686
        %700 = vmatpush.msra.mxu0 %v680
        %701 = vmatpush.msra.mxu0 %v674
        %702 = vmatpush.msra.mxu0 %v668
        %703 = vmatpush.msra.mxu0 %v662
        %704 = vmatpush.msra.mxu0 %v656
        %705 = vmatpush.msra.mxu0 %v650
        %706 = vmatpush.msra.mxu0 %v644
        %707 = vmatpush.msra.mxu0 %v638
        %708 = vmatpush.msra.mxu0 %v632
        %709 = vmatpush.msra.mxu0 %v626
        %710 = vmatpush.msra.mxu0 %v620
        %711 = vmatpush.msra.mxu0 %v614
        %712 = vmatpush.msra.mxu0 %v608
        %713 = vmatpush.msra.mxu0 %v602
        %714 = vmatmul.f32.gmra.mxu0 %v599
        %v715 = vpop.f32.mrf.mxu0
        %v716 = vadd.f32 0.0, %v715
        %717 = vmatmul.f32.gmra.mxu0 %v600
        %v718 = vpop.f32.mrf.mxu0
        %v719 = vadd.f32 0.0, %v718
        %720 = vmatmul.f32.gmra.mxu0 %v601
        %v721 = vpop.f32.mrf.mxu0
        %v722 = vadd.f32 0.0, %v721
        %723 = vdwg.mxu0
        %724 = vmatpush.msra.mxu0 %v693
        %725 = vmatpush.msra.mxu0 %v687
        %726 = vmatpush.msra.mxu0 %v681
        %727 = vmatpush.msra.mxu0 %v675
        %728 = vmatpush.msra.mxu0 %v669
        %729 = vmatpush.msra.mxu0 %v663
        %730 = vmatpush.msra.mxu0 %v657
        %731 = vmatpush.msra.mxu0 %v651
        %732 = vmatpush.msra.mxu0 %v645
        %733 = vmatpush.msra.mxu0 %v639
        %734 = vmatpush.msra.mxu0 %v633
        %735 = vmatpush.msra.mxu0 %v627
        %736 = vmatpush.msra.mxu0 %v621
        %737 = vmatpush.msra.mxu0 %v615
        %738 = vmatpush.msra.mxu0 %v609
        %739 = vmatpush.msra.mxu0 %v603
        %740 = vmatmul.f32.gmra.mxu0 %v599
        %v741 = vpop.f32.mrf.mxu0
        %v742 = vadd.f32 0.0, %v741
        %743 = vmatmul.f32.gmra.mxu0 %v600
        %v744 = vpop.f32.mrf.mxu0
        %v745 = vadd.f32 0.0, %v744
        %746 = vmatmul.f32.gmra.mxu0 %v601
        %v747 = vpop.f32.mrf.mxu0
        %v748 = vadd.f32 0.0, %v747
        %749 = vdwg.mxu0
        %750 = vmatpush.msra.mxu0 %v694
        %751 = vmatpush.msra.mxu0 %v688
        %752 = vmatpush.msra.mxu0 %v682
        %753 = vmatpush.msra.mxu0 %v676
        %754 = vmatpush.msra.mxu0 %v670
        %755 = vmatpush.msra.mxu0 %v664
        %756 = vmatpush.msra.mxu0 %v658
        %757 = vmatpush.msra.mxu0 %v652
        %758 = vmatpush.msra.mxu0 %v646
        %759 = vmatpush.msra.mxu0 %v640
        %760 = vmatpush.msra.mxu0 %v634
        %761 = vmatpush.msra.mxu0 %v628
        %762 = vmatpush.msra.mxu0 %v622
        %763 = vmatpush.msra.mxu0 %v616
        %764 = vmatpush.msra.mxu0 %v610
        %765 = vmatpush.msra.mxu0 %v604
        %766 = vmatmul.f32.gmra.mxu0 %v599
        %v767 = vpop.f32.mrf.mxu0
        %v768 = vadd.f32 0.0, %v767
        %769 = vmatmul.f32.gmra.mxu0 %v600
        %v770 = vpop.f32.mrf.mxu0
        %v771 = vadd.f32 0.0, %v770
        %772 = vmatmul.f32.gmra.mxu0 %v601
        %v773 = vpop.f32.mrf.mxu0
        %v774 = vadd.f32 0.0, %v773
        %775 = vdwg.mxu0
        %776 = vmatpush.msra.mxu0 %v695
        %777 = vmatpush.msra.mxu0 %v689
        %778 = vmatpush.msra.mxu0 %v683
        %779 = vmatpush.msra.mxu0 %v677
        %780 = vmatpush.msra.mxu0 %v671
        %781 = vmatpush.msra.mxu0 %v665
        %782 = vmatpush.msra.mxu0 %v659
        %783 = vmatpush.msra.mxu0 %v653
        %784 = vmatpush.msra.mxu0 %v647
        %785 = vmatpush.msra.mxu0 %v641
        %786 = vmatpush.msra.mxu0 %v635
        %787 = vmatpush.msra.mxu0 %v629
        %788 = vmatpush.msra.mxu0 %v623
        %789 = vmatpush.msra.mxu0 %v617
        %790 = vmatpush.msra.mxu0 %v611
        %791 = vmatpush.msra.mxu0 %v605
        %792 = vmatmul.f32.gmra.mxu0 %v599
        %v793 = vpop.f32.mrf.mxu0
        %v794 = vadd.f32 0.0, %v793
        %795 = vmatmul.f32.gmra.mxu0 %v600
        %v796 = vpop.f32.mrf.mxu0
        %v797 = vadd.f32 0.0, %v796
        %798 = vmatmul.f32.gmra.mxu0 %v601
        %v799 = vpop.f32.mrf.mxu0
        %v800 = vadd.f32 0.0, %v799
        %801 = vdwg.mxu0
        %802 = vmatpush.msra.mxu0 %v696
        %803 = vmatpush.msra.mxu0 %v690
        %804 = vmatpush.msra.mxu0 %v684
        %805 = vmatpush.msra.mxu0 %v678
        %806 = vmatpush.msra.mxu0 %v672
        %807 = vmatpush.msra.mxu0 %v666
        %808 = vmatpush.msra.mxu0 %v660
        %809 = vmatpush.msra.mxu0 %v654
        %810 = vmatpush.msra.mxu0 %v648
        %811 = vmatpush.msra.mxu0 %v642
        %812 = vmatpush.msra.mxu0 %v636
        %813 = vmatpush.msra.mxu0 %v630
        %814 = vmatpush.msra.mxu0 %v624
        %815 = vmatpush.msra.mxu0 %v618
        %816 = vmatpush.msra.mxu0 %v612
        %817 = vmatpush.msra.mxu0 %v606
        %818 = vmatmul.f32.gmra.mxu0 %v599
        %v819 = vpop.f32.mrf.mxu0
        %v820 = vadd.f32 0.0, %v819
        %821 = vmatmul.f32.gmra.mxu0 %v600
        %v822 = vpop.f32.mrf.mxu0
        %v823 = vadd.f32 0.0, %v822
        %824 = vmatmul.f32.gmra.mxu0 %v601
        %v825 = vpop.f32.mrf.mxu0
        %v826 = vadd.f32 0.0, %v825
        %827 = vdwg.mxu0
        %828 = vmatpush.msra.mxu0 %v697
        %829 = vmatpush.msra.mxu0 %v691
        %830 = vmatpush.msra.mxu0 %v685
        %831 = vmatpush.msra.mxu0 %v679
        %832 = vmatpush.msra.mxu0 %v673
        %833 = vmatpush.msra.mxu0 %v667
        %834 = vmatpush.msra.mxu0 %v661
        %835 = vmatpush.msra.mxu0 %v655
        %836 = vmatpush.msra.mxu0 %v649
        %837 = vmatpush.msra.mxu0 %v643
        %838 = vmatpush.msra.mxu0 %v637
        %839 = vmatpush.msra.mxu0 %v631
        %840 = vmatpush.msra.mxu0 %v625
        %841 = vmatpush.msra.mxu0 %v619
        %842 = vmatpush.msra.mxu0 %v613
        %843 = vmatpush.msra.mxu0 %v607
        %844 = vmatmul.f32.gmra.mxu0 %v599
        %v845 = vpop.f32.mrf.mxu0
        %v846 = vadd.f32 0.0, %v845
        %847 = vmatmul.f32.gmra.mxu0 %v600
        %v848 = vpop.f32.mrf.mxu0
        %v849 = vadd.f32 0.0, %v848
        %850 = vmatmul.f32.gmra.mxu0 %v601
        %v851 = vpop.f32.mrf.mxu0
        %v852 = vadd.f32 0.0, %v851
        %853 = vdwg.mxu0
        %v854 = vadd.f32 %v581, %v716
        %v855 = vadd.f32 %v582, %v742
        %v856 = vadd.f32 %v583, %v768
        %v857 = vadd.f32 %v584, %v794
        %v858 = vadd.f32 %v585, %v820
        %v859 = vadd.f32 %v586, %v846
        %v860 = vadd.f32 %v587, %v719
        %v861 = vadd.f32 %v588, %v745
        %v862 = vadd.f32 %v589, %v771
        %v863 = vadd.f32 %v590, %v797
        %v864 = vadd.f32 %v591, %v823
        %v865 = vadd.f32 %v592, %v849
        %v866 = vadd.f32 %v593, %v722
        %v867 = vadd.f32 %v594, %v748
        %v868 = vadd.f32 %v595, %v774
        %v869 = vadd.f32 %v596, %v800
        %v870 = vadd.f32 %v597, %v826
        %v871 = vadd.f32 %v598, %v852
        %872 = vst [vmem:[#allocation3] sm:$0xff] %v854
        %873 = vst [vmem:[#allocation3 + $0x8] sm:$0xff] %v855
        %874 = vst [vmem:[#allocation3 + $0x10] sm:$0xff] %v856
        %875 = vst [vmem:[#allocation3 + $0x18] sm:$0xff] %v857
        %876 = vst [vmem:[#allocation3 + $0x20] sm:$0xff] %v858
        %877 = vst [vmem:[#allocation3 + $0x28] sm:$0xff] %v859
        %878 = vst [vmem:[#allocation3 + $0x30] sm:$0xff] %v860
        %879 = vst [vmem:[#allocation3 + $0x38] sm:$0xff] %v861
        %880 = vst [vmem:[#allocation3 + $0x40] sm:$0xff] %v862
        %881 = vst [vmem:[#allocation3 + $0x48] sm:$0xff] %v863
        %882 = vst [vmem:[#allocation3 + $0x50] sm:$0xff] %v864
        %883 = vst [vmem:[#allocation3 + $0x58] sm:$0xff] %v865
        %884 = vst [vmem:[#allocation3 + $0x60] sm:$0xff] %v866
        %885 = vst [vmem:[#allocation3 + $0x68] sm:$0xff] %v867
        %886 = vst [vmem:[#allocation3 + $0x70] sm:$0xff] %v868
        %887 = vst [vmem:[#allocation3 + $0x78] sm:$0xff] %v869
        %888 = vst [vmem:[#allocation3 + $0x80] sm:$0xff] %v870
        %889 = vst [vmem:[#allocation3 + $0x88] sm:$0xff] %v871
        %p890 = scmp.eq.s32.totalorder %s30, 2
        // Predicated region
        $region73: #{tpu_custom_call.1} parent=43 // pred_check
          %p891 = pneg %p890
        $region74: #{tpu_custom_call.1} parent=43 // pred_check_branch
          %893 = sbr.rel (%p891) target = $region76
        $region75: #{tpu_custom_call.1} parent=43 // pred_region
          %s894 = sld [smem:[#allocation10]]
          %v895 = vld [vmem:[#allocation3] sm:$0xff]
          %v896 = vld [vmem:[#allocation3 + $0x8] sm:$0xff]
          %v897 = vstv %s894
          %v898 = vmul.f32 %v897, %v895
          %v899 = vmul.f32 %v897, %v896
          %s900 = sld [smem:[#allocation10 + $0x1]]
          %v901 = vld [vmem:[#allocation3 + $0x10] sm:$0xff]
          %v902 = vld [vmem:[#allocation3 + $0x18] sm:$0xff]
          %v903 = vstv %s900
          %v904 = vmul.f32 %v903, %v901
          %v905 = vmul.f32 %v903, %v902
          %v906 = vadd.f32 %v898, %v904
          %v907 = vadd.f32 %v899, %v905
          %s908 = sld [smem:[#allocation10 + $0x2]]
          %v909 = vld [vmem:[#allocation3 + $0x20] sm:$0xff]
          %v910 = vld [vmem:[#allocation3 + $0x28] sm:$0xff]
          %v911 = vstv %s908
          %v912 = vmul.f32 %v911, %v909
          %v913 = vmul.f32 %v911, %v910
          %v914 = vadd.f32 %v906, %v912
          %v915 = vadd.f32 %v907, %v913
          %s916 = sld [smem:[#allocation10 + $0x3]]
          %v917 = vld [vmem:[#allocation3 + $0x30] sm:$0xff]
          %v918 = vld [vmem:[#allocation3 + $0x38] sm:$0xff]
          %v919 = vstv %s916
          %v920 = vmul.f32 %v919, %v917
          %v921 = vmul.f32 %v919, %v918
          %v922 = vadd.f32 %v914, %v920
          %v923 = vadd.f32 %v915, %v921
          %s924 = sld [smem:[#allocation10 + $0x4]]
          %v925 = vld [vmem:[#allocation3 + $0x40] sm:$0xff]
          %v926 = vld [vmem:[#allocation3 + $0x48] sm:$0xff]
          %v927 = vstv %s924
          %v928 = vmul.f32 %v927, %v925
          %v929 = vmul.f32 %v927, %v926
          %v930 = vadd.f32 %v922, %v928
          %v931 = vadd.f32 %v923, %v929
          %s932 = sld [smem:[#allocation10 + $0x5]]
          %v933 = vld [vmem:[#allocation3 + $0x50] sm:$0xff]
          %v934 = vld [vmem:[#allocation3 + $0x58] sm:$0xff]
          %v935 = vstv %s932
          %v936 = vmul.f32 %v935, %v933
          %v937 = vmul.f32 %v935, %v934
          %v938 = vadd.f32 %v930, %v936
          %v939 = vadd.f32 %v931, %v937
          %s940 = sld [smem:[#allocation10 + $0x6]]
          %v941 = vld [vmem:[#allocation3 + $0x60] sm:$0xff]
          %v942 = vld [vmem:[#allocation3 + $0x68] sm:$0xff]
          %v943 = vstv %s940
          %v944 = vmul.f32 %v943, %v941
          %v945 = vmul.f32 %v943, %v942
          %v946 = vadd.f32 %v938, %v944
          %v947 = vadd.f32 %v939, %v945
          %s948 = sld [smem:[#allocation10 + $0x7]]
          %v949 = vld [vmem:[#allocation3 + $0x70] sm:$0xff]
          %v950 = vld [vmem:[#allocation3 + $0x78] sm:$0xff]
          %v951 = vstv %s948
          %v952 = vmul.f32 %v951, %v949
          %v953 = vmul.f32 %v951, %v950
          %v954 = vadd.f32 %v946, %v952
          %v955 = vadd.f32 %v947, %v953
          %s956 = sld [smem:[#allocation10 + $0x8]]
          %v957 = vld [vmem:[#allocation3 + $0x80] sm:$0xff]
          %v958 = vld [vmem:[#allocation3 + $0x88] sm:$0xff]
          %v959 = vstv %s956
          %v960 = vmul.f32 %v959, %v957
          %v961 = vmul.f32 %v959, %v958
          %v962 = vadd.f32 %v954, %v960
          %v963 = vadd.f32 %v955, %v961
          %s964 = sld [smem:[#allocation11]]
          %v965 = vstv %s964
          %v966 = vadd.f32 %v962, %v965
          %v967 = vadd.f32 %v963, %v965
          %968 = vst [vmem:[#allocation16] sm:$0xff] %v966
          %969 = vst [vmem:[#allocation16 + $0x8] sm:$0xff] %v967
          %s970 = sld [smem:[#allocation10 + $0x9]]
          %v971 = vld [vmem:[#allocation3] sm:$0xff]
          %v972 = vld [vmem:[#allocation3 + $0x8] sm:$0xff]
          %v973 = vstv %s970
          %v974 = vmul.f32 %v973, %v971
          %v975 = vmul.f32 %v973, %v972
          %s976 = sld [smem:[#allocation10 + $0xa]]
          %v977 = vld [vmem:[#allocation3 + $0x10] sm:$0xff]
          %v978 = vld [vmem:[#allocation3 + $0x18] sm:$0xff]
          %v979 = vstv %s976
          %v980 = vmul.f32 %v979, %v977
          %v981 = vmul.f32 %v979, %v978
          %v982 = vadd.f32 %v974, %v980
          %v983 = vadd.f32 %v975, %v981
          %s984 = sld [smem:[#allocation10 + $0xb]]
          %v985 = vld [vmem:[#allocation3 + $0x20] sm:$0xff]
          %v986 = vld [vmem:[#allocation3 + $0x28] sm:$0xff]
          %v987 = vstv %s984
          %v988 = vmul.f32 %v987, %v985
          %v989 = vmul.f32 %v987, %v986
          %v990 = vadd.f32 %v982, %v988
          %v991 = vadd.f32 %v983, %v989
          %s992 = sld [smem:[#allocation10 + $0xc]]
          %v993 = vld [vmem:[#allocation3 + $0x30] sm:$0xff]
          %v994 = vld [vmem:[#allocation3 + $0x38] sm:$0xff]
          %v995 = vstv %s992
          %v996 = vmul.f32 %v995, %v993
          %v997 = vmul.f32 %v995, %v994
          %v998 = vadd.f32 %v990, %v996
          %v999 = vadd.f32 %v991, %v997
          %s1000 = sld [smem:[#allocation10 + $0xd]]
          %v1001 = vld [vmem:[#allocation3 + $0x40] sm:$0xff]
          %v1002 = vld [vmem:[#allocation3 + $0x48] sm:$0xff]
          %v1003 = vstv %s1000
          %v1004 = vmul.f32 %v1003, %v1001
          %v1005 = vmul.f32 %v1003, %v1002
          %v1006 = vadd.f32 %v998, %v1004
          %v1007 = vadd.f32 %v999, %v1005
          %s1008 = sld [smem:[#allocation10 + $0xe]]
          %v1009 = vld [vmem:[#allocation3 + $0x50] sm:$0xff]
          %v1010 = vld [vmem:[#allocation3 + $0x58] sm:$0xff]
          %v1011 = vstv %s1008
          %v1012 = vmul.f32 %v1011, %v1009
          %v1013 = vmul.f32 %v1011, %v1010
          %v1014 = vadd.f32 %v1006, %v1012
          %v1015 = vadd.f32 %v1007, %v1013
          %s1016 = sld [smem:[#allocation10 + $0xf]]
          %v1017 = vld [vmem:[#allocation3 + $0x60] sm:$0xff]
          %v1018 = vld [vmem:[#allocation3 + $0x68] sm:$0xff]
          %v1019 = vstv %s1016
          %v1020 = vmul.f32 %v1019, %v1017
          %v1021 = vmul.f32 %v1019, %v1018
          %v1022 = vadd.f32 %v1014, %v1020
          %v1023 = vadd.f32 %v1015, %v1021
          %s1024 = sld [smem:[#allocation10 + $0x10]]
          %v1025 = vld [vmem:[#allocation3 + $0x70] sm:$0xff]
          %v1026 = vld [vmem:[#allocation3 + $0x78] sm:$0xff]
          %v1027 = vstv %s1024
          %v1028 = vmul.f32 %v1027, %v1025
          %v1029 = vmul.f32 %v1027, %v1026
          %v1030 = vadd.f32 %v1022, %v1028
          %v1031 = vadd.f32 %v1023, %v1029
          %s1032 = sld [smem:[#allocation10 + $0x11]]
          %v1033 = vld [vmem:[#allocation3 + $0x80] sm:$0xff]
          %v1034 = vld [vmem:[#allocation3 + $0x88] sm:$0xff]
          %v1035 = vstv %s1032
          %v1036 = vmul.f32 %v1035, %v1033
          %v1037 = vmul.f32 %v1035, %v1034
          %v1038 = vadd.f32 %v1030, %v1036
          %v1039 = vadd.f32 %v1031, %v1037
          %s1040 = sld [smem:[#allocation11 + $0x1]]
          %v1041 = vstv %s1040
          %v1042 = vadd.f32 %v1038, %v1041
          %v1043 = vadd.f32 %v1039, %v1041
          %s1044 = scalar_lea.vmem [#allocation16], 16
          %1045 = vst [vmem:[%s1044] sm:$0xff] %v1042
          %1046 = vst [vmem:[%s1044 + $0x8] sm:$0xff] %v1043
          %s1047 = sld [smem:[#allocation10 + $0x12]]
          %v1048 = vld [vmem:[#allocation3] sm:$0xff]
          %v1049 = vld [vmem:[#allocation3 + $0x8] sm:$0xff]
          %v1050 = vstv %s1047
          %v1051 = vmul.f32 %v1050, %v1048
          %v1052 = vmul.f32 %v1050, %v1049
          %s1053 = sld [smem:[#allocation10 + $0x13]]
          %v1054 = vld [vmem:[#allocation3 + $0x10] sm:$0xff]
          %v1055 = vld [vmem:[#allocation3 + $0x18] sm:$0xff]
          %v1056 = vstv %s1053
          %v1057 = vmul.f32 %v1056, %v1054
          %v1058 = vmul.f32 %v1056, %v1055
          %v1059 = vadd.f32 %v1051, %v1057
          %v1060 = vadd.f32 %v1052, %v1058
          %s1061 = sld [smem:[#allocation10 + $0x14]]
          %v1062 = vld [vmem:[#allocation3 + $0x20] sm:$0xff]
          %v1063 = vld [vmem:[#allocation3 + $0x28] sm:$0xff]
          %v1064 = vstv %s1061
          %v1065 = vmul.f32 %v1064, %v1062
          %v1066 = vmul.f32 %v1064, %v1063
          %v1067 = vadd.f32 %v1059, %v1065
          %v1068 = vadd.f32 %v1060, %v1066
          %s1069 = sld [smem:[#allocation10 + $0x15]]
          %v1070 = vld [vmem:[#allocation3 + $0x30] sm:$0xff]
          %v1071 = vld [vmem:[#allocation3 + $0x38] sm:$0xff]
          %v1072 = vstv %s1069
          %v1073 = vmul.f32 %v1072, %v1070
          %v1074 = vmul.f32 %v1072, %v1071
          %v1075 = vadd.f32 %v1067, %v1073
          %v1076 = vadd.f32 %v1068, %v1074
          %s1077 = sld [smem:[#allocation10 + $0x16]]
          %v1078 = vld [vmem:[#allocation3 + $0x40] sm:$0xff]
          %v1079 = vld [vmem:[#allocation3 + $0x48] sm:$0xff]
          %v1080 = vstv %s1077
          %v1081 = vmul.f32 %v1080, %v1078
          %v1082 = vmul.f32 %v1080, %v1079
          %v1083 = vadd.f32 %v1075, %v1081
          %v1084 = vadd.f32 %v1076, %v1082
          %s1085 = sld [smem:[#allocation10 + $0x17]]
          %v1086 = vld [vmem:[#allocation3 + $0x50] sm:$0xff]
          %v1087 = vld [vmem:[#allocation3 + $0x58] sm:$0xff]
          %v1088 = vstv %s1085
          %v1089 = vmul.f32 %v1088, %v1086
          %v1090 = vmul.f32 %v1088, %v1087
          %v1091 = vadd.f32 %v1083, %v1089
          %v1092 = vadd.f32 %v1084, %v1090
          %s1093 = sld [smem:[#allocation10 + $0x18]]
          %v1094 = vld [vmem:[#allocation3 + $0x60] sm:$0xff]
          %v1095 = vld [vmem:[#allocation3 + $0x68] sm:$0xff]
          %v1096 = vstv %s1093
          %v1097 = vmul.f32 %v1096, %v1094
          %v1098 = vmul.f32 %v1096, %v1095
          %v1099 = vadd.f32 %v1091, %v1097
          %v1100 = vadd.f32 %v1092, %v1098
          %s1101 = sld [smem:[#allocation10 + $0x19]]
          %v1102 = vld [vmem:[#allocation3 + $0x70] sm:$0xff]
          %v1103 = vld [vmem:[#allocation3 + $0x78] sm:$0xff]
          %v1104 = vstv %s1101
          %v1105 = vmul.f32 %v1104, %v1102
          %v1106 = vmul.f32 %v1104, %v1103
          %v1107 = vadd.f32 %v1099, %v1105
          %v1108 = vadd.f32 %v1100, %v1106
          %s1109 = sld [smem:[#allocation10 + $0x1a]]
          %v1110 = vld [vmem:[#allocation3 + $0x80] sm:$0xff]
          %v1111 = vld [vmem:[#allocation3 + $0x88] sm:$0xff]
          %v1112 = vstv %s1109
          %v1113 = vmul.f32 %v1112, %v1110
          %v1114 = vmul.f32 %v1112, %v1111
          %v1115 = vadd.f32 %v1107, %v1113
          %v1116 = vadd.f32 %v1108, %v1114
          %s1117 = sld [smem:[#allocation11 + $0x2]]
          %v1118 = vstv %s1117
          %v1119 = vadd.f32 %v1115, %v1118
          %v1120 = vadd.f32 %v1116, %v1118
          %s1121 = scalar_lea.vmem [#allocation16], 32
          %1122 = vst [vmem:[%s1121] sm:$0xff] %v1119
          %1123 = vst [vmem:[%s1121 + $0x8] sm:$0xff] %v1120
          %s1124 = sld [smem:[#allocation10 + $0x1b]]
          %v1125 = vld [vmem:[#allocation3] sm:$0xff]
          %v1126 = vld [vmem:[#allocation3 + $0x8] sm:$0xff]
          %v1127 = vstv %s1124
          %v1128 = vmul.f32 %v1127, %v1125
          %v1129 = vmul.f32 %v1127, %v1126
          %s1130 = sld [smem:[#allocation10 + $0x1c]]
          %v1131 = vld [vmem:[#allocation3 + $0x10] sm:$0xff]
          %v1132 = vld [vmem:[#allocation3 + $0x18] sm:$0xff]
          %v1133 = vstv %s1130
          %v1134 = vmul.f32 %v1133, %v1131
          %v1135 = vmul.f32 %v1133, %v1132
          %v1136 = vadd.f32 %v1128, %v1134
          %v1137 = vadd.f32 %v1129, %v1135
          %s1138 = sld [smem:[#allocation10 + $0x1d]]
          %v1139 = vld [vmem:[#allocation3 + $0x20] sm:$0xff]
          %v1140 = vld [vmem:[#allocation3 + $0x28] sm:$0xff]
          %v1141 = vstv %s1138
          %v1142 = vmul.f32 %v1141, %v1139
          %v1143 = vmul.f32 %v1141, %v1140
          %v1144 = vadd.f32 %v1136, %v1142
          %v1145 = vadd.f32 %v1137, %v1143
          %s1146 = sld [smem:[#allocation10 + $0x1e]]
          %v1147 = vld [vmem:[#allocation3 + $0x30] sm:$0xff]
          %v1148 = vld [vmem:[#allocation3 + $0x38] sm:$0xff]
          %v1149 = vstv %s1146
          %v1150 = vmul.f32 %v1149, %v1147
          %v1151 = vmul.f32 %v1149, %v1148
          %v1152 = vadd.f32 %v1144, %v1150
          %v1153 = vadd.f32 %v1145, %v1151
          %s1154 = sld [smem:[#allocation10 + $0x1f]]
          %v1155 = vld [vmem:[#allocation3 + $0x40] sm:$0xff]
          %v1156 = vld [vmem:[#allocation3 + $0x48] sm:$0xff]
          %v1157 = vstv %s1154
          %v1158 = vmul.f32 %v1157, %v1155
          %v1159 = vmul.f32 %v1157, %v1156
          %v1160 = vadd.f32 %v1152, %v1158
          %v1161 = vadd.f32 %v1153, %v1159
          %s1162 = sld [smem:[#allocation10 + $0x20]]
          %v1163 = vld [vmem:[#allocation3 + $0x50] sm:$0xff]
          %v1164 = vld [vmem:[#allocation3 + $0x58] sm:$0xff]
          %v1165 = vstv %s1162
          %v1166 = vmul.f32 %v1165, %v1163
          %v1167 = vmul.f32 %v1165, %v1164
          %v1168 = vadd.f32 %v1160, %v1166
          %v1169 = vadd.f32 %v1161, %v1167
          %s1170 = sld [smem:[#allocation10 + $0x21]]
          %v1171 = vld [vmem:[#allocation3 + $0x60] sm:$0xff]
          %v1172 = vld [vmem:[#allocation3 + $0x68] sm:$0xff]
          %v1173 = vstv %s1170
          %v1174 = vmul.f32 %v1173, %v1171
          %v1175 = vmul.f32 %v1173, %v1172
          %v1176 = vadd.f32 %v1168, %v1174
          %v1177 = vadd.f32 %v1169, %v1175
          %s1178 = sld [smem:[#allocation10 + $0x22]]
          %v1179 = vld [vmem:[#allocation3 + $0x70] sm:$0xff]
          %v1180 = vld [vmem:[#allocation3 + $0x78] sm:$0xff]
          %v1181 = vstv %s1178
          %v1182 = vmul.f32 %v1181, %v1179
          %v1183 = vmul.f32 %v1181, %v1180
          %v1184 = vadd.f32 %v1176, %v1182
          %v1185 = vadd.f32 %v1177, %v1183
          %s1186 = sld [smem:[#allocation10 + $0x23]]
          %v1187 = vld [vmem:[#allocation3 + $0x80] sm:$0xff]
          %v1188 = vld [vmem:[#allocation3 + $0x88] sm:$0xff]
          %v1189 = vstv %s1186
          %v1190 = vmul.f32 %v1189, %v1187
          %v1191 = vmul.f32 %v1189, %v1188
          %v1192 = vadd.f32 %v1184, %v1190
          %v1193 = vadd.f32 %v1185, %v1191
          %s1194 = sld [smem:[#allocation11 + $0x3]]
          %v1195 = vstv %s1194
          %v1196 = vadd.f32 %v1192, %v1195
          %v1197 = vadd.f32 %v1193, %v1195
          %s1198 = scalar_lea.vmem [#allocation16], 48
          %1199 = vst [vmem:[%s1198] sm:$0xff] %v1196
          %1200 = vst [vmem:[%s1198 + $0x8] sm:$0xff] %v1197
          %s1201 = sld [smem:[#allocation10 + $0x24]]
          %v1202 = vld [vmem:[#allocation3] sm:$0xff]
          %v1203 = vld [vmem:[#allocation3 + $0x8] sm:$0xff]
          %v1204 = vstv %s1201
          %v1205 = vmul.f32 %v1204, %v1202
          %v1206 = vmul.f32 %v1204, %v1203
          %s1207 = sld [smem:[#allocation10 + $0x25]]
          %v1208 = vld [vmem:[#allocation3 + $0x10] sm:$0xff]
          %v1209 = vld [vmem:[#allocation3 + $0x18] sm:$0xff]
          %v1210 = vstv %s1207
          %v1211 = vmul.f32 %v1210, %v1208
          %v1212 = vmul.f32 %v1210, %v1209
          %v1213 = vadd.f32 %v1205, %v1211
          %v1214 = vadd.f32 %v1206, %v1212
          %s1215 = sld [smem:[#allocation10 + $0x26]]
          %v1216 = vld [vmem:[#allocation3 + $0x20] sm:$0xff]
          %v1217 = vld [vmem:[#allocation3 + $0x28] sm:$0xff]
          %v1218 = vstv %s1215
          %v1219 = vmul.f32 %v1218, %v1216
          %v1220 = vmul.f32 %v1218, %v1217
          %v1221 = vadd.f32 %v1213, %v1219
          %v1222 = vadd.f32 %v1214, %v1220
          %s1223 = sld [smem:[#allocation10 + $0x27]]
          %v1224 = vld [vmem:[#allocation3 + $0x30] sm:$0xff]
          %v1225 = vld [vmem:[#allocation3 + $0x38] sm:$0xff]
          %v1226 = vstv %s1223
          %v1227 = vmul.f32 %v1226, %v1224
          %v1228 = vmul.f32 %v1226, %v1225
          %v1229 = vadd.f32 %v1221, %v1227
          %v1230 = vadd.f32 %v1222, %v1228
          %s1231 = sld [smem:[#allocation10 + $0x28]]
          %v1232 = vld [vmem:[#allocation3 + $0x40] sm:$0xff]
          %v1233 = vld [vmem:[#allocation3 + $0x48] sm:$0xff]
          %v1234 = vstv %s1231
          %v1235 = vmul.f32 %v1234, %v1232
          %v1236 = vmul.f32 %v1234, %v1233
          %v1237 = vadd.f32 %v1229, %v1235
          %v1238 = vadd.f32 %v1230, %v1236
          %s1239 = sld [smem:[#allocation10 + $0x29]]
          %v1240 = vld [vmem:[#allocation3 + $0x50] sm:$0xff]
          %v1241 = vld [vmem:[#allocation3 + $0x58] sm:$0xff]
          %v1242 = vstv %s1239
          %v1243 = vmul.f32 %v1242, %v1240
          %v1244 = vmul.f32 %v1242, %v1241
          %v1245 = vadd.f32 %v1237, %v1243
          %v1246 = vadd.f32 %v1238, %v1244
          %s1247 = sld [smem:[#allocation10 + $0x2a]]
          %v1248 = vld [vmem:[#allocation3 + $0x60] sm:$0xff]
          %v1249 = vld [vmem:[#allocation3 + $0x68] sm:$0xff]
          %v1250 = vstv %s1247
          %v1251 = vmul.f32 %v1250, %v1248
          %v1252 = vmul.f32 %v1250, %v1249
          %v1253 = vadd.f32 %v1245, %v1251
          %v1254 = vadd.f32 %v1246, %v1252
          %s1255 = sld [smem:[#allocation10 + $0x2b]]
          %v1256 = vld [vmem:[#allocation3 + $0x70] sm:$0xff]
          %v1257 = vld [vmem:[#allocation3 + $0x78] sm:$0xff]
          %v1258 = vstv %s1255
          %v1259 = vmul.f32 %v1258, %v1256
          %v1260 = vmul.f32 %v1258, %v1257
          %v1261 = vadd.f32 %v1253, %v1259
          %v1262 = vadd.f32 %v1254, %v1260
          %s1263 = sld [smem:[#allocation10 + $0x2c]]
          %v1264 = vld [vmem:[#allocation3 + $0x80] sm:$0xff]
          %v1265 = vld [vmem:[#allocation3 + $0x88] sm:$0xff]
          %v1266 = vstv %s1263
          %v1267 = vmul.f32 %v1266, %v1264
          %v1268 = vmul.f32 %v1266, %v1265
          %v1269 = vadd.f32 %v1261, %v1267
          %v1270 = vadd.f32 %v1262, %v1268
          %s1271 = sld [smem:[#allocation11 + $0x4]]
          %v1272 = vstv %s1271
          %v1273 = vadd.f32 %v1269, %v1272
          %v1274 = vadd.f32 %v1270, %v1272
          %s1275 = scalar_lea.vmem [#allocation16], 64
          %1276 = vst [vmem:[%s1275] sm:$0xff] %v1273
          %1277 = vst [vmem:[%s1275 + $0x8] sm:$0xff] %v1274
          %s1278 = sld [smem:[#allocation10 + $0x2d]]
          %v1279 = vld [vmem:[#allocation3] sm:$0xff]
          %v1280 = vld [vmem:[#allocation3 + $0x8] sm:$0xff]
          %v1281 = vstv %s1278
          %v1282 = vmul.f32 %v1281, %v1279
          %v1283 = vmul.f32 %v1281, %v1280
          %s1284 = sld [smem:[#allocation10 + $0x2e]]
          %v1285 = vld [vmem:[#allocation3 + $0x10] sm:$0xff]
          %v1286 = vld [vmem:[#allocation3 + $0x18] sm:$0xff]
          %v1287 = vstv %s1284
          %v1288 = vmul.f32 %v1287, %v1285
          %v1289 = vmul.f32 %v1287, %v1286
          %v1290 = vadd.f32 %v1282, %v1288
          %v1291 = vadd.f32 %v1283, %v1289
          %s1292 = sld [smem:[#allocation10 + $0x2f]]
          %v1293 = vld [vmem:[#allocation3 + $0x20] sm:$0xff]
          %v1294 = vld [vmem:[#allocation3 + $0x28] sm:$0xff]
          %v1295 = vstv %s1292
          %v1296 = vmul.f32 %v1295, %v1293
          %v1297 = vmul.f32 %v1295, %v1294
          %v1298 = vadd.f32 %v1290, %v1296
          %v1299 = vadd.f32 %v1291, %v1297
          %s1300 = sld [smem:[#allocation10 + $0x30]]
          %v1301 = vld [vmem:[#allocation3 + $0x30] sm:$0xff]
          %v1302 = vld [vmem:[#allocation3 + $0x38] sm:$0xff]
          %v1303 = vstv %s1300
          %v1304 = vmul.f32 %v1303, %v1301
          %v1305 = vmul.f32 %v1303, %v1302
          %v1306 = vadd.f32 %v1298, %v1304
          %v1307 = vadd.f32 %v1299, %v1305
          %s1308 = sld [smem:[#allocation10 + $0x31]]
          %v1309 = vld [vmem:[#allocation3 + $0x40] sm:$0xff]
          %v1310 = vld [vmem:[#allocation3 + $0x48] sm:$0xff]
          %v1311 = vstv %s1308
          %v1312 = vmul.f32 %v1311, %v1309
          %v1313 = vmul.f32 %v1311, %v1310
          %v1314 = vadd.f32 %v1306, %v1312
          %v1315 = vadd.f32 %v1307, %v1313
          %s1316 = sld [smem:[#allocation10 + $0x32]]
          %v1317 = vld [vmem:[#allocation3 + $0x50] sm:$0xff]
          %v1318 = vld [vmem:[#allocation3 + $0x58] sm:$0xff]
          %v1319 = vstv %s1316
          %v1320 = vmul.f32 %v1319, %v1317
          %v1321 = vmul.f32 %v1319, %v1318
          %v1322 = vadd.f32 %v1314, %v1320
          %v1323 = vadd.f32 %v1315, %v1321
          %s1324 = sld [smem:[#allocation10 + $0x33]]
          %v1325 = vld [vmem:[#allocation3 + $0x60] sm:$0xff]
          %v1326 = vld [vmem:[#allocation3 + $0x68] sm:$0xff]
          %v1327 = vstv %s1324
          %v1328 = vmul.f32 %v1327, %v1325
          %v1329 = vmul.f32 %v1327, %v1326
          %v1330 = vadd.f32 %v1322, %v1328
          %v1331 = vadd.f32 %v1323, %v1329
          %s1332 = sld [smem:[#allocation10 + $0x34]]
          %v1333 = vld [vmem:[#allocation3 + $0x70] sm:$0xff]
          %v1334 = vld [vmem:[#allocation3 + $0x78] sm:$0xff]
          %v1335 = vstv %s1332
          %v1336 = vmul.f32 %v1335, %v1333
          %v1337 = vmul.f32 %v1335, %v1334
          %v1338 = vadd.f32 %v1330, %v1336
          %v1339 = vadd.f32 %v1331, %v1337
          %s1340 = sld [smem:[#allocation10 + $0x35]]
          %v1341 = vld [vmem:[#allocation3 + $0x80] sm:$0xff]
          %v1342 = vld [vmem:[#allocation3 + $0x88] sm:$0xff]
          %v1343 = vstv %s1340
          %v1344 = vmul.f32 %v1343, %v1341
          %v1345 = vmul.f32 %v1343, %v1342
          %v1346 = vadd.f32 %v1338, %v1344
          %v1347 = vadd.f32 %v1339, %v1345
          %s1348 = sld [smem:[#allocation11 + $0x5]]
          %v1349 = vstv %s1348
          %v1350 = vadd.f32 %v1346, %v1349
          %v1351 = vadd.f32 %v1347, %v1349
          %s1352 = scalar_lea.vmem [#allocation16], 80
          %1353 = vst [vmem:[%s1352] sm:$0xff] %v1350
          %1354 = vst [vmem:[%s1352 + $0x8] sm:$0xff] %v1351
          %s1355 = sld [smem:[#allocation10 + $0x36]]
          %v1356 = vld [vmem:[#allocation3] sm:$0xff]
          %v1357 = vld [vmem:[#allocation3 + $0x8] sm:$0xff]
          %v1358 = vstv %s1355
          %v1359 = vmul.f32 %v1358, %v1356
          %v1360 = vmul.f32 %v1358, %v1357
          %s1361 = sld [smem:[#allocation10 + $0x37]]
          %v1362 = vld [vmem:[#allocation3 + $0x10] sm:$0xff]
          %v1363 = vld [vmem:[#allocation3 + $0x18] sm:$0xff]
          %v1364 = vstv %s1361
          %v1365 = vmul.f32 %v1364, %v1362
          %v1366 = vmul.f32 %v1364, %v1363
          %v1367 = vadd.f32 %v1359, %v1365
          %v1368 = vadd.f32 %v1360, %v1366
          %s1369 = sld [smem:[#allocation10 + $0x38]]
          %v1370 = vld [vmem:[#allocation3 + $0x20] sm:$0xff]
          %v1371 = vld [vmem:[#allocation3 + $0x28] sm:$0xff]
          %v1372 = vstv %s1369
          %v1373 = vmul.f32 %v1372, %v1370
          %v1374 = vmul.f32 %v1372, %v1371
          %v1375 = vadd.f32 %v1367, %v1373
          %v1376 = vadd.f32 %v1368, %v1374
          %s1377 = sld [smem:[#allocation10 + $0x39]]
          %v1378 = vld [vmem:[#allocation3 + $0x30] sm:$0xff]
          %v1379 = vld [vmem:[#allocation3 + $0x38] sm:$0xff]
          %v1380 = vstv %s1377
          %v1381 = vmul.f32 %v1380, %v1378
          %v1382 = vmul.f32 %v1380, %v1379
          %v1383 = vadd.f32 %v1375, %v1381
          %v1384 = vadd.f32 %v1376, %v1382
          %s1385 = sld [smem:[#allocation10 + $0x3a]]
          %v1386 = vld [vmem:[#allocation3 + $0x40] sm:$0xff]
          %v1387 = vld [vmem:[#allocation3 + $0x48] sm:$0xff]
          %v1388 = vstv %s1385
          %v1389 = vmul.f32 %v1388, %v1386
          %v1390 = vmul.f32 %v1388, %v1387
          %v1391 = vadd.f32 %v1383, %v1389
          %v1392 = vadd.f32 %v1384, %v1390
          %s1393 = sld [smem:[#allocation10 + $0x3b]]
          %v1394 = vld [vmem:[#allocation3 + $0x50] sm:$0xff]
          %v1395 = vld [vmem:[#allocation3 + $0x58] sm:$0xff]
          %v1396 = vstv %s1393
          %v1397 = vmul.f32 %v1396, %v1394
          %v1398 = vmul.f32 %v1396, %v1395
          %v1399 = vadd.f32 %v1391, %v1397
          %v1400 = vadd.f32 %v1392, %v1398
          %s1401 = sld [smem:[#allocation10 + $0x3c]]
          %v1402 = vld [vmem:[#allocation3 + $0x60] sm:$0xff]
          %v1403 = vld [vmem:[#allocation3 + $0x68] sm:$0xff]
          %v1404 = vstv %s1401
          %v1405 = vmul.f32 %v1404, %v1402
          %v1406 = vmul.f32 %v1404, %v1403
          %v1407 = vadd.f32 %v1399, %v1405
          %v1408 = vadd.f32 %v1400, %v1406
          %s1409 = sld [smem:[#allocation10 + $0x3d]]
          %v1410 = vld [vmem:[#allocation3 + $0x70] sm:$0xff]
          %v1411 = vld [vmem:[#allocation3 + $0x78] sm:$0xff]
          %v1412 = vstv %s1409
          %v1413 = vmul.f32 %v1412, %v1410
          %v1414 = vmul.f32 %v1412, %v1411
          %v1415 = vadd.f32 %v1407, %v1413
          %v1416 = vadd.f32 %v1408, %v1414
          %s1417 = sld [smem:[#allocation10 + $0x3e]]
          %v1418 = vld [vmem:[#allocation3 + $0x80] sm:$0xff]
          %v1419 = vld [vmem:[#allocation3 + $0x88] sm:$0xff]
          %v1420 = vstv %s1417
          %v1421 = vmul.f32 %v1420, %v1418
          %v1422 = vmul.f32 %v1420, %v1419
          %v1423 = vadd.f32 %v1415, %v1421
          %v1424 = vadd.f32 %v1416, %v1422
          %s1425 = sld [smem:[#allocation11 + $0x6]]
          %v1426 = vstv %s1425
          %v1427 = vadd.f32 %v1423, %v1426
          %v1428 = vadd.f32 %v1424, %v1426
          %s1429 = scalar_lea.vmem [#allocation16], 96
          %1430 = vst [vmem:[%s1429] sm:$0xff] %v1427
          %1431 = vst [vmem:[%s1429 + $0x8] sm:$0xff] %v1428
          %s1432 = sld [smem:[#allocation10 + $0x3f]]
          %v1433 = vld [vmem:[#allocation3] sm:$0xff]
          %v1434 = vld [vmem:[#allocation3 + $0x8] sm:$0xff]
          %v1435 = vstv %s1432
          %v1436 = vmul.f32 %v1435, %v1433
          %v1437 = vmul.f32 %v1435, %v1434
          %s1438 = sld [smem:[#allocation10 + $0x40]]
          %v1439 = vld [vmem:[#allocation3 + $0x10] sm:$0xff]
          %v1440 = vld [vmem:[#allocation3 + $0x18] sm:$0xff]
          %v1441 = vstv %s1438
          %v1442 = vmul.f32 %v1441, %v1439
          %v1443 = vmul.f32 %v1441, %v1440
          %v1444 = vadd.f32 %v1436, %v1442
          %v1445 = vadd.f32 %v1437, %v1443
          %s1446 = sld [smem:[#allocation10 + $0x41]]
          %v1447 = vld [vmem:[#allocation3 + $0x20] sm:$0xff]
          %v1448 = vld [vmem:[#allocation3 + $0x28] sm:$0xff]
          %v1449 = vstv %s1446
          %v1450 = vmul.f32 %v1449, %v1447
          %v1451 = vmul.f32 %v1449, %v1448
          %v1452 = vadd.f32 %v1444, %v1450
          %v1453 = vadd.f32 %v1445, %v1451
          %s1454 = sld [smem:[#allocation10 + $0x42]]
          %v1455 = vld [vmem:[#allocation3 + $0x30] sm:$0xff]
          %v1456 = vld [vmem:[#allocation3 + $0x38] sm:$0xff]
          %v1457 = vstv %s1454
          %v1458 = vmul.f32 %v1457, %v1455
          %v1459 = vmul.f32 %v1457, %v1456
          %v1460 = vadd.f32 %v1452, %v1458
          %v1461 = vadd.f32 %v1453, %v1459
          %s1462 = sld [smem:[#allocation10 + $0x43]]
          %v1463 = vld [vmem:[#allocation3 + $0x40] sm:$0xff]
          %v1464 = vld [vmem:[#allocation3 + $0x48] sm:$0xff]
          %v1465 = vstv %s1462
          %v1466 = vmul.f32 %v1465, %v1463
          %v1467 = vmul.f32 %v1465, %v1464
          %v1468 = vadd.f32 %v1460, %v1466
          %v1469 = vadd.f32 %v1461, %v1467
          %s1470 = sld [smem:[#allocation10 + $0x44]]
          %v1471 = vld [vmem:[#allocation3 + $0x50] sm:$0xff]
          %v1472 = vld [vmem:[#allocation3 + $0x58] sm:$0xff]
          %v1473 = vstv %s1470
          %v1474 = vmul.f32 %v1473, %v1471
          %v1475 = vmul.f32 %v1473, %v1472
          %v1476 = vadd.f32 %v1468, %v1474
          %v1477 = vadd.f32 %v1469, %v1475
          %s1478 = sld [smem:[#allocation10 + $0x45]]
          %v1479 = vld [vmem:[#allocation3 + $0x60] sm:$0xff]
          %v1480 = vld [vmem:[#allocation3 + $0x68] sm:$0xff]
          %v1481 = vstv %s1478
          %v1482 = vmul.f32 %v1481, %v1479
          %v1483 = vmul.f32 %v1481, %v1480
          %v1484 = vadd.f32 %v1476, %v1482
          %v1485 = vadd.f32 %v1477, %v1483
          %s1486 = sld [smem:[#allocation10 + $0x46]]
          %v1487 = vld [vmem:[#allocation3 + $0x70] sm:$0xff]
          %v1488 = vld [vmem:[#allocation3 + $0x78] sm:$0xff]
          %v1489 = vstv %s1486
          %v1490 = vmul.f32 %v1489, %v1487
          %v1491 = vmul.f32 %v1489, %v1488
          %v1492 = vadd.f32 %v1484, %v1490
          %v1493 = vadd.f32 %v1485, %v1491
          %s1494 = sld [smem:[#allocation10 + $0x47]]
          %v1495 = vld [vmem:[#allocation3 + $0x80] sm:$0xff]
          %v1496 = vld [vmem:[#allocation3 + $0x88] sm:$0xff]
          %v1497 = vstv %s1494
          %v1498 = vmul.f32 %v1497, %v1495
          %v1499 = vmul.f32 %v1497, %v1496
          %v1500 = vadd.f32 %v1492, %v1498
          %v1501 = vadd.f32 %v1493, %v1499
          %s1502 = sld [smem:[#allocation11 + $0x7]]
          %v1503 = vstv %s1502
          %v1504 = vadd.f32 %v1500, %v1503
          %v1505 = vadd.f32 %v1501, %v1503
          %s1506 = scalar_lea.vmem [#allocation16], 112
          %1507 = vst [vmem:[%s1506] sm:$0xff] %v1504
          %1508 = vst [vmem:[%s1506 + $0x8] sm:$0xff] %v1505
        $region76: #{tpu_custom_call.1} parent=43 // pred_fallthru
          _
        // Predicated region
        $region77: #{tpu_custom_call.1} parent=43 // pred_check
          %p1509 = pneg %p191
        $region78: #{tpu_custom_call.1} parent=43 // pred_check_branch
          %1511 = sbr.rel (%p1509) target = $region80
        $region79: #{tpu_custom_call.1} parent=43 // pred_region
          %1513 = vsyncadd [#allocation6], 0
          %s1514 = smul.addr %s29, 2
          %s1515 = smul.addr %s1514, 8
          %s1516 = scalar_lea.hbm %s6, %s1515
          %s1517 = sshll.u32 [#allocation16], 4
          %s1518 = int_to_ptr.vmem [resolvable:$true] %s1517
          %s1519 = sshll.u32 %s1516, 4
          %s1520 = int_to_ptr.hbm [resolvable:$true] %s1519
          %1525 = dma.vmem_to_hbm [thread:$0]  %s1518, 2048, %s1520, [#allocation6], 256, 256, 16
        $region80: #{tpu_custom_call.1} parent=43 // pred_fallthru
          _
        // Predicated region
        $region81: #{tpu_custom_call.1} parent=43 // pred_check
          %p1526 = pneg %p191
        $region82: #{tpu_custom_call.1} parent=43 // pred_check_branch
          %1528 = sbr.rel (%p1526) target = $region84
        $region83: #{tpu_custom_call.1} parent=43 // pred_region
          %1530 = dma.done [#allocation6], 2048
        $region84: #{tpu_custom_call.1} parent=43 // pred_fallthru
          _
      $region44: #{tpu_custom_call.1} parent=5 // pred_fallthru
        _
      %p1531 = scmp.le.s32.totalorder 2, %s20
      // Predicated region
      $region85: #{tpu_custom_call.1} parent=5 // pred_check
        %p1532 = pneg %p1531
      $region86: #{tpu_custom_call.1} parent=5 // pred_check_branch
        %1534 = sbr.rel (%p1532) target = $region88
      $region87: #{tpu_custom_call.1} parent=5 // pred_region
        %s1535 = ssub.s32 %s20, 2
      $region88: #{tpu_custom_call.1} parent=5 // pred_fallthru
        _
    $region6: #{tpu_custom_call.1} parent=1 // loop_footer
      %s24 = sadd.s32 1, %s20
    $region7: #{tpu_custom_call.1} parent=1 // loop_footer_branch
      %19 = sbr.rel target = $region3
    $region8: #{tpu_custom_call.1} parent=1 // loop_exit
      _
    %1536 = vsyncpa [#allocation5], 1
    %s1537 = scalar_lea.sflag [#allocation5], 1
    %1538 = vsyncpa %s1537, 1
    %1539 = vsyncpa [#allocation15], 1
    %s1540 = scalar_lea.sflag [#allocation15], 1
    %1541 = vsyncpa %s1540, 1
    %1542 = vsyncpa [#allocation6], 1
    %s1543 = scalar_lea.sflag [#allocation6], 1
    %1544 = vsyncpa %s1543, 1
    %1545 = vsyncpa [#allocation7], 1
    %s1546 = scalar_lea.sflag [#allocation7], 1
    %1547 = vsyncpa %s1546, 1
    %1548 = vsyncpa [#allocation9], 1
    %1549 = vsyncpa [#allocation12], 1

</llo_original>
